<compile_context>
chip_gen: v7x
topology: tpu7x:2x2x1
jax: 0.10.0
libtpu: 0.0.40
codegen_flags: <defaults>
</compile_context>

<pallas_src>
import functools

import jax
import jax.numpy as jnp
from jax.experimental import pallas as pl
from jax.experimental.pallas import tpu as pltpu

# Re-derive when scaling tiles: v7x has only 64 MiB physical VMEM (v5e/v6e: 128).
VMEM_LIMIT_BYTES = 32 * 1024 * 1024


# ---------------------------------------------------------------------------
# Kernel A: RMSNorm + Q/K/V projections + interleaved RoPE   (grid over S tiles)
# ---------------------------------------------------------------------------
def qkv_rope_kernel(x_ref, anorm_ref, wq_ref, wk_ref, wv_ref,
                    cos_q_ref, sin_q_ref, cos_k_ref, sin_k_ref,
                    q_ref, k_ref, v_ref, *, eps):
    x = x_ref[...]                                          # [TS, D] f32
    ms = jnp.mean(x * x, axis=-1, keepdims=True)
    xn = (x * jax.lax.rsqrt(ms + eps) * anorm_ref[...]).astype(jnp.bfloat16)

    # bf16 MXU inputs, f32 accumulation.
    q = jnp.dot(xn, wq_ref[...], preferred_element_type=jnp.float32)
    k = jnp.dot(xn, wk_ref[...], preferred_element_type=jnp.float32)
    v = jnp.dot(xn, wv_ref[...], preferred_element_type=jnp.float32)

    def rope(t, cos, sin):
        # Interleaved-pair rotation: even lanes need t[:, j+1], odd need
        # t[:, j-1]; done with two XLU rolls + a lane-parity select (no matmul).
        w = t.shape[-1]
        lane = jax.lax.broadcasted_iota(jnp.int32, t.shape, 1)
        swapped = jnp.where(lane % 2 == 0,
                            pltpu.roll(t, w - 1, 1),        # t[:, (j+1) % w]
                            pltpu.roll(t, 1, 1))            # t[:, (j-1) % w]
        return t * cos + swapped * sin                      # sin carries the sign

    q_ref[...] = rope(q, cos_q_ref[...], sin_q_ref[...]).astype(q_ref.dtype)
    k_ref[...] = rope(k, cos_k_ref[...], sin_k_ref[...]).astype(k_ref.dtype)
    v_ref[...] = v.astype(v_ref.dtype)


# ---------------------------------------------------------------------------
# Kernel B: GQA flash attention (batched over kv-groups, online softmax)
# ---------------------------------------------------------------------------
def flash_gqa_kernel(q_ref, k_ref, v_ref, o_ref, *, kv_tile, scale):
    q = q_ref[:, 0]                                         # [G, RQ, Hd] bf16
    g, rq, hd = q.shape
    s_len = k_ref.shape[1]
    num_kv = s_len // kv_tile

    m = jnp.full((g, rq, 1), -jnp.inf, jnp.float32)
    l = jnp.zeros((g, rq, 1), jnp.float32)
    acc = jnp.zeros((g, rq, hd), jnp.float32)

    # Static unrolled KV-block loop (small trip count at these sizes).
    # TODO(synk): for long sequences move KV blocks onto a grid axis / fori_loop.
    for j in range(num_kv):
        kj = k_ref[:, j * kv_tile:(j + 1) * kv_tile, :]     # [G, TK, Hd]
        vj = v_ref[:, j * kv_tile:(j + 1) * kv_tile, :]
        s = jax.lax.dot_general(
            q, kj, (((2,), (2,)), ((0,), (0,))),
            preferred_element_type=jnp.float32) * scale     # [G, RQ, TK]
        m_new = jnp.maximum(m, jnp.max(s, axis=-1, keepdims=True))
        alpha = jnp.exp(m - m_new)
        p = jnp.exp(s - m_new)
        l = alpha * l + jnp.sum(p, axis=-1, keepdims=True)
        pv = jax.lax.dot_general(
            p.astype(jnp.bfloat16), vj, (((2,), (1,)), ((0,), (0,))),
            preferred_element_type=jnp.float32)             # [G, RQ, Hd]
        acc = alpha * acc + pv
        m = m_new

    o = acc * pl.reciprocal(l, approx=True)                 # EUP, not VALU divide
    o_ref[:, 0] = o.astype(o_ref.dtype)


# ---------------------------------------------------------------------------
# Kernel C: wo projection + residual + RMSNorm + SwiGLU FFN + residual
# ---------------------------------------------------------------------------
def wo_ffn_kernel(x_ref, attn_ref, fnorm_ref, wo_ref, w1_ref, w2_ref, w3_ref,
                  out_ref, *, eps):
    x = x_ref[...]                                          # [TS, D] f32
    r = jnp.dot(attn_ref[...], wo_ref[...], preferred_element_type=jnp.float32)
    h = x + r
    ms = jnp.mean(h * h, axis=-1, keepdims=True)
    hn = (h * jax.lax.rsqrt(ms + eps) * fnorm_ref[...]).astype(jnp.bfloat16)
    # TODO(synk): for large hidden_dim stream w1/w3/w2 K-tiles over an extra
    # grid axis with a VMEM accumulator instead of keeping them fully resident.
    gate = jnp.dot(hn, w1_ref[...], preferred_element_type=jnp.float32)
    up = jnp.dot(hn, w3_ref[...], preferred_element_type=jnp.float32)
    act = (jax.nn.silu(gate) * up).astype(jnp.bfloat16)
    ff = jnp.dot(act, w2_ref[...], preferred_element_type=jnp.float32)
    out_ref[...] = h + ff


# ---------------------------------------------------------------------------
# Wrapper
# ---------------------------------------------------------------------------
def transformer_block(x, params, *, n_heads, n_kv_heads, head_dim, eps,
                      rope_theta, q_tile=64, kv_tile=128):
    S, D = x.shape
    H, G, Hd = n_heads, n_kv_heads, head_dim
    rep = H // G
    HD, KVD = H * Hd, G * Hd
    hidden = params["w1"].shape[1]
    assert S % q_tile == 0 and S % kv_tile == 0 and q_tile % 8 == 0
    nT = S // q_tile
    rq = rep * q_tile

    f32, bf16 = jnp.float32, jnp.bfloat16
    cparams = pltpu.CompilerParams(dimension_semantics=("parallel",),
                                   vmem_limit_bytes=VMEM_LIMIT_BYTES)

    # Weights to bf16 (MXU native); norm weights as explicit (1, D) f32 rows.
    wq, wk, wv, wo = (params[n].astype(bf16) for n in ("wq", "wk", "wv", "wo"))
    w1, w2, w3 = (params[n].astype(bf16) for n in ("w1", "w2", "w3"))
    anorm = params["anorm"].reshape(1, D).astype(f32)
    fnorm = params["fnorm"].reshape(1, D).astype(f32)

    # RoPE tables (interleaved layout, rotation sign folded into the sin table).
    inv_freq = 1.0 / (rope_theta ** (jnp.arange(0, Hd, 2, dtype=f32) / Hd))
    ang = jnp.arange(S, dtype=f32)[:, None] * inv_freq[None, :]      # [S, Hd/2]
    cos_pair = jnp.repeat(jnp.cos(ang), 2, axis=-1)                  # [c, c, ..]
    sin_sign = jnp.stack([-jnp.sin(ang), jnp.sin(ang)], axis=-1).reshape(S, Hd)
    cos_q, sin_q = jnp.tile(cos_pair, (1, H)), jnp.tile(sin_sign, (1, H))
    cos_k, sin_k = jnp.tile(cos_pair, (1, G)), jnp.tile(sin_sign, (1, G))

    row = lambda w: pl.BlockSpec((q_tile, w), lambda i: (i, 0))
    full2 = lambda a, b: pl.BlockSpec((a, b), lambda i: (0, 0))

    # ---- stage A: RMSNorm + QKV + RoPE -------------------------------------
    q2, k2, v2 = pl.pallas_call(
        functools.partial(qkv_rope_kernel, eps=eps),
        grid=(nT,),
        in_specs=[row(D), full2(1, D), full2(D, HD), full2(D, KVD),
                  full2(D, KVD), row(HD), row(HD), row(KVD), row(KVD)],
        out_specs=[row(HD), row(KVD), row(KVD)],
        out_shape=[jax.ShapeDtypeStruct((S, HD), bf16),
                   jax.ShapeDtypeStruct((S, KVD), bf16),
                   jax.ShapeDtypeStruct((S, KVD), bf16)],
        compiler_params=cparams,
    )(x, anorm, wq, wk, wv, cos_q, sin_q, cos_k, sin_k)

    # ---- layout glue (XLA): head-grouped, seq-tiled views -------------------
    qg = (q2.reshape(nT, q_tile, G, rep, Hd)
            .transpose(2, 0, 3, 1, 4)                      # [G, nT, rep, TS, Hd]
            .reshape(G, nT, rq, Hd))
    kg = k2.reshape(S, G, Hd).transpose(1, 0, 2)           # [G, S, Hd]
    vg = v2.reshape(S, G, Hd).transpose(1, 0, 2)

    # ---- stage B: GQA flash attention ---------------------------------------
    og = pl.pallas_call(
        functools.partial(flash_gqa_kernel, kv_tile=kv_tile, scale=Hd ** -0.5),
        grid=(nT,),
        in_specs=[pl.BlockSpec((G, 1, rq, Hd), lambda i: (0, i, 0, 0)),
                  pl.BlockSpec((G, S, Hd), lambda i: (0, 0, 0)),
                  pl.BlockSpec((G, S, Hd), lambda i: (0, 0, 0))],
        out_specs=pl.BlockSpec((G, 1, rq, Hd), lambda i: (0, i, 0, 0)),
        out_shape=jax.ShapeDtypeStruct((G, nT, rq, Hd), bf16),
        compiler_params=cparams,
    )(qg, kg, vg)

    # ---- layout glue (XLA): back to [S, H*Hd] -------------------------------
    attn = (og.reshape(G, nT, rep, q_tile, Hd)
              .transpose(1, 3, 0, 2, 4)                    # [nT, TS, G, rep, Hd]
              .reshape(S, HD))

    # ---- stage C: wo + residual + RMSNorm + SwiGLU + residual ---------------
    out = pl.pallas_call(
        functools.partial(wo_ffn_kernel, eps=eps),
        grid=(nT,),
        in_specs=[row(D), row(HD), full2(1, D), full2(HD, D),
                  full2(D, hidden), full2(hidden, D), full2(D, hidden)],
        out_specs=row(D),
        out_shape=jax.ShapeDtypeStruct((S, D), f32),
        input_output_aliases={0: 0},                       # residual written in place
        compiler_params=cparams,
    )(x, attn, fnorm, wo, w1, w2, w3)
    return out


# ---------------------------------------------------------------------------
# Pure-JAX reference (torch semantics, f32 HIGHEST precision)
# ---------------------------------------------------------------------------
def reference_block(x, wq, wk, wv, wo, w1, w2, w3, anorm, fnorm, cos, sin,
                    *, n_heads, n_kv_heads, head_dim, eps):
    hi = jax.lax.Precision.HIGHEST
    S, _ = x.shape

    def rms(v, w):
        ms = jnp.mean(v * v, axis=-1, keepdims=True)
        return v * jax.lax.rsqrt(ms + eps) * w

    def rope(t):                                           # interleaved pairs
        s_, h_, d_ = t.shape
        tr = t.reshape(s_, h_, d_ // 2, 2)
        xr, xi = tr[..., 0], tr[..., 1]
        c, s = cos[:, None, :], sin[:, None, :]
        return jnp.stack([xr * c - xi * s, xr * s + xi * c],
                         axis=-1).reshape(s_, h_, d_)

    xn = rms(x, anorm)
    q = jnp.dot(xn, wq, precision=hi).reshape(S, n_heads, head_dim)
    k = jnp.dot(xn, wk, precision=hi).reshape(S, n_kv_heads, head_dim)
    v = jnp.dot(xn, wv, precision=hi).reshape(S, n_kv_heads, head_dim)
    q, k = rope(q), rope(k)
    rep = n_heads // n_kv_heads
    k = jnp.repeat(k, rep, axis=1)                         # repeat_kv, dim=1
    v = jnp.repeat(v, rep, axis=1)
    scores = jnp.einsum("qhd,khd->hqk", q, k, precision=hi) * head_dim ** -0.5
    p = jax.nn.softmax(scores, axis=-1)                    # no mask (cache=None)
    o = jnp.einsum("hqk,khd->qhd", p, v, precision=hi).reshape(S, -1)
    h = x + jnp.dot(o, wo, precision=hi)
    hn = rms(h, fnorm)
    ff = jnp.dot(jax.nn.silu(jnp.dot(hn, w1, precision=hi))
                 * jnp.dot(hn, w3, precision=hi), w2, precision=hi)
    return h + ff


if __name__ == "__main__":
    # Small (but lane-dense, TPU-friendly) ModelArgs:
    #   dim=256, n_heads=4, n_kv_heads=2, head_dim=128, hidden_dim=512,
    #   norm_eps=1e-5, rope_theta=10000, seqlen_sum=256
    S, D = 256, 256
    n_heads, n_kv_heads, head_dim = 4, 2, 128
    hidden = 512
    eps = 1e-5
    theta = 10000.0

    key = jax.random.PRNGKey(0)
    ks = jax.random.split(key, 8)

    def linear(k, fan_in, fan_out):                        # nn.Linear init, transposed
        b = 1.0 / (fan_in ** 0.5)
        return jax.random.uniform(k, (fan_in, fan_out), jnp.float32, -b, b)

    x = jax.random.normal(ks[0], (S, D), jnp.float32)
    wq = linear(ks[1], D, n_heads * head_dim)
    wk = linear(ks[2], D, n_kv_heads * head_dim)
    wv = linear(ks[3], D, n_kv_heads * head_dim)
    wo = linear(ks[4], n_heads * head_dim, D)
    w1 = linear(ks[5], D, hidden)
    w2 = linear(ks[6], hidden, D)
    w3 = linear(ks[7], D, hidden)
    anorm = jnp.ones((D,), jnp.float32)                    # RMSNorm init = ones
    fnorm = jnp.ones((D,), jnp.float32)

    # Reference RoPE tables.
    inv_freq = 1.0 / (theta ** (jnp.arange(0, head_dim, 2, dtype=jnp.float32)
                                / head_dim))
    ang = jnp.arange(S, dtype=jnp.float32)[:, None] * inv_freq[None, :]
    cos, sin = jnp.cos(ang), jnp.sin(ang)

    # Reference first (the final Pallas kernel aliases x's buffer in place).
    ref = reference_block(x, wq, wk, wv, wo, w1, w2, w3, anorm, fnorm, cos, sin,
                          n_heads=n_heads, n_kv_heads=n_kv_heads,
                          head_dim=head_dim, eps=eps)
    ref = jax.block_until_ready(ref)

    params = dict(wq=wq, wk=wk, wv=wv, wo=wo, w1=w1, w2=w2, w3=w3,
                  anorm=anorm, fnorm=fnorm)
    out = transformer_block(x, params, n_heads=n_heads, n_kv_heads=n_kv_heads,
                            head_dim=head_dim, eps=eps, rope_theta=theta,
                            q_tile=64, kv_tile=128)
    out = jax.block_until_ready(out)

    # bf16 MXU inputs (f32 accumulation) vs f32 reference => loose-ish tolerance.
    if not jnp.allclose(out, ref, rtol=5e-2, atol=5e-2):
        raise AssertionError("Pallas TransformerBlock does not match reference")

    print("KERNEL_OK")
</pallas_src>

<mosaic_0001>
module attributes {stable_mosaic.version = 11 : i64} {
  func.func @qkv_rope_kernel(%arg0: i32, %arg1: memref<64x256xf32, #tpu.memory_space<vmem>>, %arg2: memref<1x256xf32, #tpu.memory_space<vmem>>, %arg3: memref<256x512xbf16, #tpu.memory_space<vmem>>, %arg4: memref<256x256xbf16, #tpu.memory_space<vmem>>, %arg5: memref<256x256xbf16, #tpu.memory_space<vmem>>, %arg6: memref<64x512xf32, #tpu.memory_space<vmem>>, %arg7: memref<64x512xf32, #tpu.memory_space<vmem>>, %arg8: memref<64x256xf32, #tpu.memory_space<vmem>>, %arg9: memref<64x256xf32, #tpu.memory_space<vmem>>, %arg10: memref<64x512xbf16, #tpu.memory_space<vmem>>, %arg11: memref<64x256xbf16, #tpu.memory_space<vmem>>, %arg12: memref<64x256xbf16, #tpu.memory_space<vmem>>) attributes {dimension_semantics = [#tpu.dimension_semantics<parallel>], iteration_bounds = array<i64: 4>, scalar_prefetch = 0 : i64, scratch_operands = 0 : i64, tpu.core_type = #tpu.core_type<tc>, window_params = [{transform_indices = @transform_0, window_bounds = array<i64: 64, 256>}, {pipeline_mode = #tpu.pipeline_mode<synchronous>, transform_indices = @transform_1, window_bounds = array<i64: 1, 256>}, {pipeline_mode = #tpu.pipeline_mode<synchronous>, transform_indices = @transform_2, window_bounds = array<i64: 256, 512>}, {pipeline_mode = #tpu.pipeline_mode<synchronous>, transform_indices = @transform_3, window_bounds = array<i64: 256, 256>}, {pipeline_mode = #tpu.pipeline_mode<synchronous>, transform_indices = @transform_4, window_bounds = array<i64: 256, 256>}, {transform_indices = @transform_5, window_bounds = array<i64: 64, 512>}, {transform_indices = @transform_6, window_bounds = array<i64: 64, 512>}, {transform_indices = @transform_7, window_bounds = array<i64: 64, 256>}, {transform_indices = @transform_8, window_bounds = array<i64: 64, 256>}, {transform_indices = @transform_9, window_bounds = array<i64: 64, 512>}, {transform_indices = @transform_10, window_bounds = array<i64: 64, 256>}, {transform_indices = @transform_11, window_bounds = array<i64: 64, 256>}]} {
    %c0 = arith.constant 0 : index
    %c0_0 = arith.constant 0 : index
    %0 = vector.load %arg1[%c0, %c0_0] : memref<64x256xf32, #tpu.memory_space<vmem>>, vector<64x256xf32>
    %1 = arith.mulf %0, %0 : vector<64x256xf32>
    %cst = arith.constant dense<0.000000e+00> : vector<64xf32>
    %2 = vector.multi_reduction <add>, %1, %cst [1] : vector<64x256xf32> to vector<64xf32>
    %3 = vector.shape_cast %2 : vector<64xf32> to vector<64x1xf32>
    %cst_1 = arith.constant 2.560000e+02 : f32
    %4 = vector.broadcast %cst_1 : f32 to vector<64x1xf32>
    %5 = arith.divf %3, %4 : vector<64x1xf32>
    %cst_2 = arith.constant 9.99999974E-6 : f32
    %6 = vector.broadcast %cst_2 : f32 to vector<64x1xf32>
    %7 = arith.addf %5, %6 : vector<64x1xf32>
    %8 = math.rsqrt %7 : vector<64x1xf32>
    %9 = vector.broadcast %8 : vector<64x1xf32> to vector<64x256xf32>
    %10 = arith.mulf %0, %9 : vector<64x256xf32>
    %c0_3 = arith.constant 0 : index
    %c0_4 = arith.constant 0 : index
    %11 = vector.load %arg2[%c0_3, %c0_4] : memref<1x256xf32, #tpu.memory_space<vmem>>, vector<1x256xf32>
    %12 = vector.broadcast %11 : vector<1x256xf32> to vector<64x256xf32>
    %13 = arith.mulf %10, %12 : vector<64x256xf32>
    %14 = arith.truncf %13 : vector<64x256xf32> to vector<64x256xbf16>
    %c0_5 = arith.constant 0 : index
    %c0_6 = arith.constant 0 : index
    %15 = vector.load %arg3[%c0_5, %c0_6] : memref<256x512xbf16, #tpu.memory_space<vmem>>, vector<256x512xbf16>
    %cst_7 = arith.constant dense<0.000000e+00> : vector<64x512xf32>
    %16 = tpu.matmul %14, %15, %cst_7 {dimension_numbers = #tpu.dot_dimension_numbers<[1], [0], [0], [1], [0, 0, 1, 1], [], []>} : vector<64x256xbf16>, vector<256x512xbf16>, vector<64x512xf32> -> vector<64x512xf32>
    %c0_8 = arith.constant 0 : index
    %c0_9 = arith.constant 0 : index
    %17 = vector.load %arg4[%c0_8, %c0_9] : memref<256x256xbf16, #tpu.memory_space<vmem>>, vector<256x256xbf16>
    %cst_10 = arith.constant dense<0.000000e+00> : vector<64x256xf32>
    %18 = tpu.matmul %14, %17, %cst_10 {dimension_numbers = #tpu.dot_dimension_numbers<[1], [0], [0], [1], [0, 0, 1, 1], [], []>} : vector<64x256xbf16>, vector<256x256xbf16>, vector<64x256xf32> -> vector<64x256xf32>
    %c0_11 = arith.constant 0 : index
    %c0_12 = arith.constant 0 : index
    %19 = vector.load %arg5[%c0_11, %c0_12] : memref<256x256xbf16, #tpu.memory_space<vmem>>, vector<256x256xbf16>
    %cst_13 = arith.constant dense<0.000000e+00> : vector<64x256xf32>
    %20 = tpu.matmul %14, %19, %cst_13 {dimension_numbers = #tpu.dot_dimension_numbers<[1], [0], [0], [1], [0, 0, 1, 1], [], []>} : vector<64x256xbf16>, vector<256x256xbf16>, vector<64x256xf32> -> vector<64x256xf32>
    %c0_14 = arith.constant 0 : index
    %c0_15 = arith.constant 0 : index
    %21 = vector.load %arg6[%c0_14, %c0_15] : memref<64x512xf32, #tpu.memory_space<vmem>>, vector<64x512xf32>
    %c0_16 = arith.constant 0 : index
    %c0_17 = arith.constant 0 : index
    %22 = vector.load %arg7[%c0_16, %c0_17] : memref<64x512xf32, #tpu.memory_space<vmem>>, vector<64x512xf32>
    %23 = tpu.iota {dimensions = array<i32: 1>} : vector<64x512xi32>
    %c2_i32 = arith.constant 2 : i32
    %c0_i32 = arith.constant 0 : i32
    %24 = arith.cmpi eq, %c2_i32, %c0_i32 : i32
    %c1_i32 = arith.constant 1 : i32
    %25 = arith.select %24, %c1_i32, %c2_i32 : i32
    %26 = vector.broadcast %25 : i32 to vector<64x512xi32>
    %27 = arith.remsi %23, %26 : vector<64x512xi32>
    %c0_i32_18 = arith.constant 0 : i32
    %28 = vector.broadcast %c0_i32_18 : i32 to vector<64x512xi32>
    %29 = arith.cmpi ne, %27, %28 : vector<64x512xi32>
    %c0_i32_19 = arith.constant 0 : i32
    %30 = vector.broadcast %c0_i32_19 : i32 to vector<64x512xi32>
    %31 = arith.cmpi slt, %27, %30 : vector<64x512xi32>
    %c0_i32_20 = arith.constant 0 : i32
    %32 = arith.cmpi slt, %25, %c0_i32_20 : i32
    %33 = vector.broadcast %32 : i1 to vector<64x512xi1>
    %34 = vector.broadcast %33 : vector<64x512xi1> to vector<64x512xi1>
    %35 = arith.xori %31, %34 : vector<64x512xi1>
    %36 = arith.andi %35, %29 : vector<64x512xi1>
    %37 = vector.broadcast %25 : i32 to vector<64x512xi32>
    %38 = arith.addi %27, %37 : vector<64x512xi32>
    %39 = arith.select %36, %38, %27 : vector<64x512xi1>, vector<64x512xi32>
    %c0_i32_21 = arith.constant 0 : i32
    %40 = vector.broadcast %c0_i32_21 : i32 to vector<64x512xi32>
    %41 = arith.cmpi eq, %39, %40 : vector<64x512xi32>
    %c511_i32 = arith.constant 511 : i32
    %42 = tpu.dynamic_rotate %16 by %c511_i32 dim 1 : vector<64x512xf32>, i32 -> vector<64x512xf32>
    %c1_i32_22 = arith.constant 1 : i32
    %43 = tpu.dynamic_rotate %16 by %c1_i32_22 dim 1 : vector<64x512xf32>, i32 -> vector<64x512xf32>
    %44 = arith.select %41, %42, %43 : vector<64x512xi1>, vector<64x512xf32>
    %45 = arith.mulf %16, %21 : vector<64x512xf32>
    %46 = arith.mulf %44, %22 : vector<64x512xf32>
    %47 = arith.addf %45, %46 : vector<64x512xf32>
    %48 = arith.truncf %47 : vector<64x512xf32> to vector<64x512xbf16>
    %c0_23 = arith.constant 0 : index
    %c0_24 = arith.constant 0 : index
    %49 = vector.load %arg10[%c0_23, %c0_24] : memref<64x512xbf16, #tpu.memory_space<vmem>>, vector<64x512xbf16>
    tpu.vector_store %arg10[%c0_23, %c0_24], %48 {strides = array<i32>} : memref<64x512xbf16, #tpu.memory_space<vmem>>, vector<64x512xbf16>,
    %c0_25 = arith.constant 0 : index
    %c0_26 = arith.constant 0 : index
    %50 = vector.load %arg8[%c0_25, %c0_26] : memref<64x256xf32, #tpu.memory_space<vmem>>, vector<64x256xf32>
    %c0_27 = arith.constant 0 : index
    %c0_28 = arith.constant 0 : index
    %51 = vector.load %arg9[%c0_27, %c0_28] : memref<64x256xf32, #tpu.memory_space<vmem>>, vector<64x256xf32>
    %52 = tpu.iota {dimensions = array<i32: 1>} : vector<64x256xi32>
    %c2_i32_29 = arith.constant 2 : i32
    %c0_i32_30 = arith.constant 0 : i32
    %53 = arith.cmpi eq, %c2_i32_29, %c0_i32_30 : i32
    %c1_i32_31 = arith.constant 1 : i32
    %54 = arith.select %53, %c1_i32_31, %c2_i32_29 : i32
    %55 = vector.broadcast %54 : i32 to vector<64x256xi32>
    %56 = arith.remsi %52, %55 : vector<64x256xi32>
    %c0_i32_32 = arith.constant 0 : i32
    %57 = vector.broadcast %c0_i32_32 : i32 to vector<64x256xi32>
    %58 = arith.cmpi ne, %56, %57 : vector<64x256xi32>
    %c0_i32_33 = arith.constant 0 : i32
    %59 = vector.broadcast %c0_i32_33 : i32 to vector<64x256xi32>
    %60 = arith.cmpi slt, %56, %59 : vector<64x256xi32>
    %c0_i32_34 = arith.constant 0 : i32
    %61 = arith.cmpi slt, %54, %c0_i32_34 : i32
    %62 = vector.broadcast %61 : i1 to vector<64x256xi1>
    %63 = vector.broadcast %62 : vector<64x256xi1> to vector<64x256xi1>
    %64 = arith.xori %60, %63 : vector<64x256xi1>
    %65 = arith.andi %64, %58 : vector<64x256xi1>
    %66 = vector.broadcast %54 : i32 to vector<64x256xi32>
    %67 = arith.addi %56, %66 : vector<64x256xi32>
    %68 = arith.select %65, %67, %56 : vector<64x256xi1>, vector<64x256xi32>
    %c0_i32_35 = arith.constant 0 : i32
    %69 = vector.broadcast %c0_i32_35 : i32 to vector<64x256xi32>
    %70 = arith.cmpi eq, %68, %69 : vector<64x256xi32>
    %c255_i32 = arith.constant 255 : i32
    %71 = tpu.dynamic_rotate %18 by %c255_i32 dim 1 : vector<64x256xf32>, i32 -> vector<64x256xf32>
    %c1_i32_36 = arith.constant 1 : i32
    %72 = tpu.dynamic_rotate %18 by %c1_i32_36 dim 1 : vector<64x256xf32>, i32 -> vector<64x256xf32>
    %73 = arith.select %70, %71, %72 : vector<64x256xi1>, vector<64x256xf32>
    %74 = arith.mulf %18, %50 : vector<64x256xf32>
    %75 = arith.mulf %73, %51 : vector<64x256xf32>
    %76 = arith.addf %74, %75 : vector<64x256xf32>
    %77 = arith.truncf %76 : vector<64x256xf32> to vector<64x256xbf16>
    %c0_37 = arith.constant 0 : index
    %c0_38 = arith.constant 0 : index
    %78 = vector.load %arg11[%c0_37, %c0_38] : memref<64x256xbf16, #tpu.memory_space<vmem>>, vector<64x256xbf16>
    tpu.vector_store %arg11[%c0_37, %c0_38], %77 {strides = array<i32>} : memref<64x256xbf16, #tpu.memory_space<vmem>>, vector<64x256xbf16>,
    %79 = arith.truncf %20 : vector<64x256xf32> to vector<64x256xbf16>
    %c0_39 = arith.constant 0 : index
    %c0_40 = arith.constant 0 : index
    %80 = vector.load %arg12[%c0_39, %c0_40] : memref<64x256xbf16, #tpu.memory_space<vmem>>, vector<64x256xbf16>
    tpu.vector_store %arg12[%c0_39, %c0_40], %79 {strides = array<i32>} : memref<64x256xbf16, #tpu.memory_space<vmem>>, vector<64x256xbf16>,
    return
  }
  func.func @transform_0(%arg0: i32) -> (i32, i32) {
    %c0_i32 = arith.constant 0 : i32
    %c0_i32_0 = arith.constant 0 : i32
    return %arg0, %c0_i32 : i32, i32
  }
  func.func @transform_1(%arg0: i32) -> (i32, i32) {
    %c0_i32 = arith.constant 0 : i32
    %c0_i32_0 = arith.constant 0 : i32
    %c0_i32_1 = arith.constant 0 : i32
    return %c0_i32, %c0_i32_0 : i32, i32
  }
  func.func @transform_2(%arg0: i32) -> (i32, i32) {
    %c0_i32 = arith.constant 0 : i32
    %c0_i32_0 = arith.constant 0 : i32
    %c0_i32_1 = arith.constant 0 : i32
    return %c0_i32, %c0_i32_0 : i32, i32
  }
  func.func @transform_3(%arg0: i32) -> (i32, i32) {
    %c0_i32 = arith.constant 0 : i32
    %c0_i32_0 = arith.constant 0 : i32
    %c0_i32_1 = arith.constant 0 : i32
    return %c0_i32, %c0_i32_0 : i32, i32
  }
  func.func @transform_4(%arg0: i32) -> (i32, i32) {
    %c0_i32 = arith.constant 0 : i32
    %c0_i32_0 = arith.constant 0 : i32
    %c0_i32_1 = arith.constant 0 : i32
    return %c0_i32, %c0_i32_0 : i32, i32
  }
  func.func @transform_5(%arg0: i32) -> (i32, i32) {
    %c0_i32 = arith.constant 0 : i32
    %c0_i32_0 = arith.constant 0 : i32
    return %arg0, %c0_i32 : i32, i32
  }
  func.func @transform_6(%arg0: i32) -> (i32, i32) {
    %c0_i32 = arith.constant 0 : i32
    %c0_i32_0 = arith.constant 0 : i32
    return %arg0, %c0_i32 : i32, i32
  }
  func.func @transform_7(%arg0: i32) -> (i32, i32) {
    %c0_i32 = arith.constant 0 : i32
    %c0_i32_0 = arith.constant 0 : i32
    return %arg0, %c0_i32 : i32, i32
  }
  func.func @transform_8(%arg0: i32) -> (i32, i32) {
    %c0_i32 = arith.constant 0 : i32
    %c0_i32_0 = arith.constant 0 : i32
    return %arg0, %c0_i32 : i32, i32
  }
  func.func @transform_9(%arg0: i32) -> (i32, i32) {
    %c0_i32 = arith.constant 0 : i32
    %c0_i32_0 = arith.constant 0 : i32
    return %arg0, %c0_i32 : i32, i32
  }
  func.func @transform_10(%arg0: i32) -> (i32, i32) {
    %c0_i32 = arith.constant 0 : i32
    %c0_i32_0 = arith.constant 0 : i32
    return %arg0, %c0_i32 : i32, i32
  }
  func.func @transform_11(%arg0: i32) -> (i32, i32) {
    %c0_i32 = arith.constant 0 : i32
    %c0_i32_0 = arith.constant 0 : i32
    return %arg0, %c0_i32 : i32, i32
  }
}

</mosaic_0001>

<llo_original>
// kernel: tpu_custom_call.1
$region0: #{tpu_custom_call.1}
  #allocation0 [shape = 'u32[]', space=smem, size = 0x4, offset = 0x4, fixed_abs, tag = 'smem constant byte address 0x4 - core index']
  #allocation1 [shape = 'u32[144,128]{1,0:T(1,128)}', space=vmem, size = 0x12000, scoped, tag = 'internal scratch']
  %s0 = inlined_call_operand.hbm [shape: f32[256,256], index: 0, kind: input, shape index: {}]
  %s1 = inlined_call_operand.vmem [shape: f32[1,256], index: 1, kind: input, shape index: {}]
  %s2 = inlined_call_operand.hbm [shape: bf16[256,512], index: 2, kind: input, shape index: {}]
  %s3 = inlined_call_operand.hbm [shape: bf16[256,256], index: 3, kind: input, shape index: {}]
  %s4 = inlined_call_operand.hbm [shape: bf16[256,256], index: 4, kind: input, shape index: {}]
  %s5 = inlined_call_operand.hbm [shape: f32[256,512], index: 5, kind: input, shape index: {}]
  %s6 = inlined_call_operand.hbm [shape: f32[256,512], index: 6, kind: input, shape index: {}]
  %s7 = inlined_call_operand.hbm [shape: f32[256,256], index: 7, kind: input, shape index: {}]
  %s8 = inlined_call_operand.hbm [shape: f32[256,256], index: 8, kind: input, shape index: {}]
  %s9 = inlined_call_operand.hbm [shape: bf16[256,512], index: 9, kind: output, shape index: {0}]
  %s10 = inlined_call_operand.hbm [shape: bf16[256,256], index: 10, kind: output, shape index: {1}]
  %s11 = inlined_call_operand.hbm [shape: bf16[256,256], index: 11, kind: output, shape index: {2}]
  %12 = xla_tuple %s9, %s10, %s11
  %s13 = sld [smem:[#allocation0]]
  $region117: #{tpu_custom_call.1} parent=0
    _
  %s15 = ssub.s32 1, %s13
  %s16 = scalar_select 0, %s15, %s13
  $region1: #{tpu_custom_call.1} parent=0
    #allocation2 [shape = 'u8[131072]{0}', space=vmem, size = 0x20000, scoped, tag = 'input window, operand 0']
    #allocation3 [shape = 's32[2]{0}', space=sflag, size = 0x8, scoped, tag = 'scoped memory for tpu_custom_call.1']
    #allocation4 [shape = 's32[2]{0}', space=sflag, size = 0x8, scoped, tag = 'scoped memory for tpu_custom_call.1']
    #allocation5 [shape = 'u8[262144]{0}', space=vmem, size = 0x40000, scoped, tag = 'input window, operand 2, single buffered']
    #allocation6 [shape = 's32[1]{0}', space=sflag, size = 0x4, scoped, tag = 'scoped memory for tpu_custom_call.1']
    #allocation7 [shape = 'u8[131072]{0}', space=vmem, size = 0x20000, scoped, tag = 'input window, operand 3, single buffered']
    #allocation8 [shape = 'u8[131072]{0}', space=vmem, size = 0x20000, scoped, tag = 'input window, operand 4, single buffered']
    #allocation9 [shape = 's32[1]{0}', space=sflag, size = 0x4, scoped, tag = 'scoped memory for tpu_custom_call.1']
    #allocation10 [shape = 'u8[262144]{0}', space=vmem, size = 0x40000, scoped, tag = 'input window, operand 5']
    #allocation11 [shape = 'u8[262144]{0}', space=vmem, size = 0x40000, scoped, tag = 'input window, operand 6']
    #allocation12 [shape = 'u8[131072]{0}', space=vmem, size = 0x20000, scoped, tag = 'input window, operand 7']
    #allocation13 [shape = 'u8[131072]{0}', space=vmem, size = 0x20000, scoped, tag = 'input window, operand 8']
    #allocation14 [shape = 'u8[131072]{0}', space=vmem, size = 0x20000, scoped, tag = 'output window, operand 0']
    #allocation15 [shape = 'u8[65536]{0}', space=vmem, size = 0x10000, scoped, tag = 'output window, operand 1']
    #allocation16 [shape = 's32[2]{0}', space=sflag, size = 0x8, scoped, tag = 'scoped memory for tpu_custom_call.1']
    #allocation17 [shape = 'u8[65536]{0}', space=vmem, size = 0x10000, scoped, tag = 'output window, operand 2']
    %17 = vsyncpa [#allocation3], 0
    %s18 = scalar_lea.sflag [#allocation3], 1
    %19 = vsyncpa %s18, 0
    %20 = vsyncpa [#allocation6], 0
    %21 = vsyncpa [#allocation9], 0
    %22 = vsyncpa [#allocation4], 0
    %s23 = scalar_lea.sflag [#allocation4], 1
    %24 = vsyncpa %s23, 0
    %25 = vsyncpa [#allocation16], 0
    %s26 = scalar_lea.sflag [#allocation16], 1
    %27 = vsyncpa %s26, 0
    loop: start=0, step=1, limit=6
    $region2: #{tpu_custom_call.1} parent=1 // loop_pre_header
      _
    $region3: #{tpu_custom_call.1} parent=1 // loop_header
      %s29 = sphi 0, %s33
      %p30 = scmp.ge.s32.totalorder %s29, 6
      %s39 = sphi 0, %s41
      %s42 = sphi 0, %s39
      %s43 = sphi 0, %s42
      %s59 = sphi 0, %s43
      %s63 = sphi 0, %s63
      %s65 = sphi 0, %s63
      %s66 = sphi 0, %s65
      %s80 = sphi 0, %s66
      %s84 = sphi 0, %s84
      %s86 = sphi 0, %s84
      %s87 = sphi 0, %s86
      %s101 = sphi 0, %s87
      %s105 = sphi 0, %s105
      %s107 = sphi 0, %s105
      %s108 = sphi 0, %s107
      %s122 = sphi 0, %s108
      %s126 = sphi 0, %s126
      %s128 = sphi 0, %s126
      %s129 = sphi 0, %s128
      %s143 = sphi 0, %s129
      %s149 = sphi 0, %s151
      %s152 = sphi 0, %s149
      %s153 = sphi 0, %s152
      %s169 = sphi 0, %s153
      %s175 = sphi 0, %s177
      %s178 = sphi 0, %s175
      %s179 = sphi 0, %s178
      %s195 = sphi 0, %s179
      %s201 = sphi 0, %s203
      %s204 = sphi 0, %s201
      %s205 = sphi 0, %s204
      %s221 = sphi 0, %s205
      %s227 = sphi 0, %s229
      %s230 = sphi 0, %s227
      %s231 = sphi 0, %s230
      %s247 = sphi 0, %s231
      %s253 = sphi 0, %s255
      %s256 = sphi 0, %s253
      %s257 = sphi 0, %s256
      %s273 = sphi 0, %s257
      %s279 = sphi 0, %s281
      %s282 = sphi 0, %s279
      %s283 = sphi 0, %s282
      %s299 = sphi 0, %s283
      %s305 = sphi 0, %s307
      %s308 = sphi 0, %s305
      %s309 = sphi 0, %s308
      %s325 = sphi 0, %s309
    $region4: #{tpu_custom_call.1} parent=1 // loop_header_branch
      %32 = sbr.rel (%p30) target = $region8
    $region5: #{tpu_custom_call.1} parent=1 // loop_body
      %s34 = ssub.s32 %s29, 1
      %s35 = ssub.s32 %s29, 2
      %s36 = sadd.s32 %s29, 1
      %s37 = ssub.s32 %s29, %s36
      %p38 = scmp.eq.s32.totalorder %s37, 0
      %s40 = sadd.s32 %s39, 1
      %s41 = scalar_select %p38, %s39, %s40
      %p44 = pneg %p38
      %p45 = scmp.eq.s32.totalorder %s29, 3
      %p46 = por %p44, %p45
      %p47 = scmp.ne.s32.totalorder %s39, %s42
      %p48 = scmp.eq.s32.totalorder %s29, 0
      %p49 = por %p47, %p48
      %p50 = scmp.ne.s32.totalorder %s39, %s42
      %p51 = scmp.eq.s32.totalorder %s34, 3
      %p52 = por %p50, %p51
      %p53 = scmp.ne.s32.totalorder %s42, %s43
      %p54 = scmp.eq.s32.totalorder %s34, 0
      %p55 = por %p53, %p54
      %p56 = scmp.ne.s32.totalorder %s42, %s43
      %p57 = scmp.eq.s32.totalorder %s35, 3
      %p58 = por %p56, %p57
      %p60 = scmp.ne.s32.totalorder %s43, %s59
      %p61 = scmp.eq.s32.totalorder %s35, 0
      %p62 = por %p60, %p61
      %s64 = sadd.s32 %s63, 1
      %p67 = scmp.eq.s32.totalorder %s29, 3
      %p68 = scmp.ne.s32.totalorder %s63, %s65
      %p69 = scmp.eq.s32.totalorder %s29, 0
      %p70 = por %p68, %p69
      %p71 = scmp.ne.s32.totalorder %s63, %s65
      %p72 = scmp.eq.s32.totalorder %s34, 3
      %p73 = por %p71, %p72
      %p74 = scmp.ne.s32.totalorder %s65, %s66
      %p75 = scmp.eq.s32.totalorder %s34, 0
      %p76 = por %p74, %p75
      %p77 = scmp.ne.s32.totalorder %s65, %s66
      %p78 = scmp.eq.s32.totalorder %s35, 3
      %p79 = por %p77, %p78
      %p81 = scmp.ne.s32.totalorder %s66, %s80
      %p82 = scmp.eq.s32.totalorder %s35, 0
      %p83 = por %p81, %p82
      %s85 = sadd.s32 %s84, 1
      %p88 = scmp.eq.s32.totalorder %s29, 3
      %p89 = scmp.ne.s32.totalorder %s84, %s86
      %p90 = scmp.eq.s32.totalorder %s29, 0
      %p91 = por %p89, %p90
      %p92 = scmp.ne.s32.totalorder %s84, %s86
      %p93 = scmp.eq.s32.totalorder %s34, 3
      %p94 = por %p92, %p93
      %p95 = scmp.ne.s32.totalorder %s86, %s87
      %p96 = scmp.eq.s32.totalorder %s34, 0
      %p97 = por %p95, %p96
      %p98 = scmp.ne.s32.totalorder %s86, %s87
      %p99 = scmp.eq.s32.totalorder %s35, 3
      %p100 = por %p98, %p99
      %p102 = scmp.ne.s32.totalorder %s87, %s101
      %p103 = scmp.eq.s32.totalorder %s35, 0
      %p104 = por %p102, %p103
      %s106 = sadd.s32 %s105, 1
      %p109 = scmp.eq.s32.totalorder %s29, 3
      %p110 = scmp.ne.s32.totalorder %s105, %s107
      %p111 = scmp.eq.s32.totalorder %s29, 0
      %p112 = por %p110, %p111
      %p113 = scmp.ne.s32.totalorder %s105, %s107
      %p114 = scmp.eq.s32.totalorder %s34, 3
      %p115 = por %p113, %p114
      %p116 = scmp.ne.s32.totalorder %s107, %s108
      %p117 = scmp.eq.s32.totalorder %s34, 0
      %p118 = por %p116, %p117
      %p119 = scmp.ne.s32.totalorder %s107, %s108
      %p120 = scmp.eq.s32.totalorder %s35, 3
      %p121 = por %p119, %p120
      %p123 = scmp.ne.s32.totalorder %s108, %s122
      %p124 = scmp.eq.s32.totalorder %s35, 0
      %p125 = por %p123, %p124
      %s127 = sadd.s32 %s126, 1
      %p130 = scmp.eq.s32.totalorder %s29, 3
      %p131 = scmp.ne.s32.totalorder %s126, %s128
      %p132 = scmp.eq.s32.totalorder %s29, 0
      %p133 = por %p131, %p132
      %p134 = scmp.ne.s32.totalorder %s126, %s128
      %p135 = scmp.eq.s32.totalorder %s34, 3
      %p136 = por %p134, %p135
      %p137 = scmp.ne.s32.totalorder %s128, %s129
      %p138 = scmp.eq.s32.totalorder %s34, 0
      %p139 = por %p137, %p138
      %p140 = scmp.ne.s32.totalorder %s128, %s129
      %p141 = scmp.eq.s32.totalorder %s35, 3
      %p142 = por %p140, %p141
      %p144 = scmp.ne.s32.totalorder %s129, %s143
      %p145 = scmp.eq.s32.totalorder %s35, 0
      %p146 = por %p144, %p145
      %s147 = ssub.s32 %s29, %s36
      %p148 = scmp.eq.s32.totalorder %s147, 0
      %s150 = sadd.s32 %s149, 1
      %s151 = scalar_select %p148, %s149, %s150
      %p154 = pneg %p148
      %p155 = scmp.eq.s32.totalorder %s29, 3
      %p156 = por %p154, %p155
      %p157 = scmp.ne.s32.totalorder %s149, %s152
      %p158 = scmp.eq.s32.totalorder %s29, 0
      %p159 = por %p157, %p158
      %p160 = scmp.ne.s32.totalorder %s149, %s152
      %p161 = scmp.eq.s32.totalorder %s34, 3
      %p162 = por %p160, %p161
      %p163 = scmp.ne.s32.totalorder %s152, %s153
      %p164 = scmp.eq.s32.totalorder %s34, 0
      %p165 = por %p163, %p164
      %p166 = scmp.ne.s32.totalorder %s152, %s153
      %p167 = scmp.eq.s32.totalorder %s35, 3
      %p168 = por %p166, %p167
      %p170 = scmp.ne.s32.totalorder %s153, %s169
      %p171 = scmp.eq.s32.totalorder %s35, 0
      %p172 = por %p170, %p171
      %s173 = ssub.s32 %s29, %s36
      %p174 = scmp.eq.s32.totalorder %s173, 0
      %s176 = sadd.s32 %s175, 1
      %s177 = scalar_select %p174, %s175, %s176
      %p180 = pneg %p174
      %p181 = scmp.eq.s32.totalorder %s29, 3
      %p182 = por %p180, %p181
      %p183 = scmp.ne.s32.totalorder %s175, %s178
      %p184 = scmp.eq.s32.totalorder %s29, 0
      %p185 = por %p183, %p184
      %p186 = scmp.ne.s32.totalorder %s175, %s178
      %p187 = scmp.eq.s32.totalorder %s34, 3
      %p188 = por %p186, %p187
      %p189 = scmp.ne.s32.totalorder %s178, %s179
      %p190 = scmp.eq.s32.totalorder %s34, 0
      %p191 = por %p189, %p190
      %p192 = scmp.ne.s32.totalorder %s178, %s179
      %p193 = scmp.eq.s32.totalorder %s35, 3
      %p194 = por %p192, %p193
      %p196 = scmp.ne.s32.totalorder %s179, %s195
      %p197 = scmp.eq.s32.totalorder %s35, 0
      %p198 = por %p196, %p197
      %s199 = ssub.s32 %s29, %s36
      %p200 = scmp.eq.s32.totalorder %s199, 0
      %s202 = sadd.s32 %s201, 1
      %s203 = scalar_select %p200, %s201, %s202
      %p206 = pneg %p200
      %p207 = scmp.eq.s32.totalorder %s29, 3
      %p208 = por %p206, %p207
      %p209 = scmp.ne.s32.totalorder %s201, %s204
      %p210 = scmp.eq.s32.totalorder %s29, 0
      %p211 = por %p209, %p210
      %p212 = scmp.ne.s32.totalorder %s201, %s204
      %p213 = scmp.eq.s32.totalorder %s34, 3
      %p214 = por %p212, %p213
      %p215 = scmp.ne.s32.totalorder %s204, %s205
      %p216 = scmp.eq.s32.totalorder %s34, 0
      %p217 = por %p215, %p216
      %p218 = scmp.ne.s32.totalorder %s204, %s205
      %p219 = scmp.eq.s32.totalorder %s35, 3
      %p220 = por %p218, %p219
      %p222 = scmp.ne.s32.totalorder %s205, %s221
      %p223 = scmp.eq.s32.totalorder %s35, 0
      %p224 = por %p222, %p223
      %s225 = ssub.s32 %s29, %s36
      %p226 = scmp.eq.s32.totalorder %s225, 0
      %s228 = sadd.s32 %s227, 1
      %s229 = scalar_select %p226, %s227, %s228
      %p232 = pneg %p226
      %p233 = scmp.eq.s32.totalorder %s29, 3
      %p234 = por %p232, %p233
      %p235 = scmp.ne.s32.totalorder %s227, %s230
      %p236 = scmp.eq.s32.totalorder %s29, 0
      %p237 = por %p235, %p236
      %p238 = scmp.ne.s32.totalorder %s227, %s230
      %p239 = scmp.eq.s32.totalorder %s34, 3
      %p240 = por %p238, %p239
      %p241 = scmp.ne.s32.totalorder %s230, %s231
      %p242 = scmp.eq.s32.totalorder %s34, 0
      %p243 = por %p241, %p242
      %p244 = scmp.ne.s32.totalorder %s230, %s231
      %p245 = scmp.eq.s32.totalorder %s35, 3
      %p246 = por %p244, %p245
      %p248 = scmp.ne.s32.totalorder %s231, %s247
      %p249 = scmp.eq.s32.totalorder %s35, 0
      %p250 = por %p248, %p249
      %s251 = ssub.s32 %s29, %s36
      %p252 = scmp.eq.s32.totalorder %s251, 0
      %s254 = sadd.s32 %s253, 1
      %s255 = scalar_select %p252, %s253, %s254
      %p258 = pneg %p252
      %p259 = scmp.eq.s32.totalorder %s29, 3
      %p260 = por %p258, %p259
      %p261 = scmp.ne.s32.totalorder %s253, %s256
      %p262 = scmp.eq.s32.totalorder %s29, 0
      %p263 = por %p261, %p262
      %p264 = scmp.ne.s32.totalorder %s253, %s256
      %p265 = scmp.eq.s32.totalorder %s34, 3
      %p266 = por %p264, %p265
      %p267 = scmp.ne.s32.totalorder %s256, %s257
      %p268 = scmp.eq.s32.totalorder %s34, 0
      %p269 = por %p267, %p268
      %p270 = scmp.ne.s32.totalorder %s256, %s257
      %p271 = scmp.eq.s32.totalorder %s35, 3
      %p272 = por %p270, %p271
      %p274 = scmp.ne.s32.totalorder %s257, %s273
      %p275 = scmp.eq.s32.totalorder %s35, 0
      %p276 = por %p274, %p275
      %s277 = ssub.s32 %s29, %s36
      %p278 = scmp.eq.s32.totalorder %s277, 0
      %s280 = sadd.s32 %s279, 1
      %s281 = scalar_select %p278, %s279, %s280
      %p284 = pneg %p278
      %p285 = scmp.eq.s32.totalorder %s29, 3
      %p286 = por %p284, %p285
      %p287 = scmp.ne.s32.totalorder %s279, %s282
      %p288 = scmp.eq.s32.totalorder %s29, 0
      %p289 = por %p287, %p288
      %p290 = scmp.ne.s32.totalorder %s279, %s282
      %p291 = scmp.eq.s32.totalorder %s34, 3
      %p292 = por %p290, %p291
      %p293 = scmp.ne.s32.totalorder %s282, %s283
      %p294 = scmp.eq.s32.totalorder %s34, 0
      %p295 = por %p293, %p294
      %p296 = scmp.ne.s32.totalorder %s282, %s283
      %p297 = scmp.eq.s32.totalorder %s35, 3
      %p298 = por %p296, %p297
      %p300 = scmp.ne.s32.totalorder %s283, %s299
      %p301 = scmp.eq.s32.totalorder %s35, 0
      %p302 = por %p300, %p301
      %s303 = ssub.s32 %s29, %s36
      %p304 = scmp.eq.s32.totalorder %s303, 0
      %s306 = sadd.s32 %s305, 1
      %s307 = scalar_select %p304, %s305, %s306
      %p310 = pneg %p304
      %p311 = scmp.eq.s32.totalorder %s29, 3
      %p312 = por %p310, %p311
      %p313 = scmp.ne.s32.totalorder %s305, %s308
      %p314 = scmp.eq.s32.totalorder %s29, 0
      %p315 = por %p313, %p314
      %p316 = scmp.ne.s32.totalorder %s305, %s308
      %p317 = scmp.eq.s32.totalorder %s34, 3
      %p318 = por %p316, %p317
      %p319 = scmp.ne.s32.totalorder %s308, %s309
      %p320 = scmp.eq.s32.totalorder %s34, 0
      %p321 = por %p319, %p320
      %p322 = scmp.ne.s32.totalorder %s308, %s309
      %p323 = scmp.eq.s32.totalorder %s35, 3
      %p324 = por %p322, %p323
      %p326 = scmp.ne.s32.totalorder %s309, %s325
      %p327 = scmp.eq.s32.totalorder %s35, 0
      %p328 = por %p326, %p327
      %p329 = scmp.le.s32.totalorder 1, %s29
      %p330 = scmp.lt.s32.totalorder %s29, 5
      %p331 = pnand %p329, %p330
      %p332 = pneg %p331
      // Predicated region
      $region9: #{tpu_custom_call.1} parent=5 // pred_check
        _
      $region10: #{tpu_custom_call.1} parent=5 // pred_check_branch
        %334 = sbr.rel (%p331) target = $region12
      $region11: #{tpu_custom_call.1} parent=5 // pred_region
        %s335 = ssub.s32 %s29, 1
        // Predicated region
        $region13: #{tpu_custom_call.1} parent=11 // pred_check
          %p336 = pneg %p76
        $region14: #{tpu_custom_call.1} parent=11 // pred_check_branch
          %338 = sbr.rel (%p336) target = $region16
        $region15: #{tpu_custom_call.1} parent=11 // pred_region
          _
        $region16: #{tpu_custom_call.1} parent=11 // pred_fallthru
          _
        // Predicated region
        $region17: #{tpu_custom_call.1} parent=11 // pred_check
          %p339 = pneg %p97
        $region18: #{tpu_custom_call.1} parent=11 // pred_check_branch
          %341 = sbr.rel (%p339) target = $region20
        $region19: #{tpu_custom_call.1} parent=11 // pred_region
          %s343 = ssub.s32 8192, 8192
          %344 = vsyncadd [#allocation6], %s343
          %s345 = sshll.u32 [#allocation5], 4
          %s346 = int_to_ptr.vmem [resolvable:$true] %s345
          %351 = dma.hbm_to_vmem [thread:$0]  %s2, 8192, %s346, [#allocation6], 256, 256, 16
        $region20: #{tpu_custom_call.1} parent=11 // pred_fallthru
          _
        // Predicated region
        $region21: #{tpu_custom_call.1} parent=11 // pred_check
          %p352 = pneg %p118
        $region22: #{tpu_custom_call.1} parent=11 // pred_check_branch
          %354 = sbr.rel (%p352) target = $region24
        $region23: #{tpu_custom_call.1} parent=11 // pred_region
          %s356 = ssub.s32 4096, 4096
          %357 = vsyncadd [#allocation6], %s356
          %s358 = sshll.u32 [#allocation7], 4
          %s359 = int_to_ptr.vmem [resolvable:$true] %s358
          %364 = dma.hbm_to_vmem [thread:$0]  %s3, 4096, %s359, [#allocation6], 128, 128, 8
        $region24: #{tpu_custom_call.1} parent=11 // pred_fallthru
          _
        // Predicated region
        $region25: #{tpu_custom_call.1} parent=11 // pred_check
          %p365 = pneg %p139
        $region26: #{tpu_custom_call.1} parent=11 // pred_check_branch
          %367 = sbr.rel (%p365) target = $region28
        $region27: #{tpu_custom_call.1} parent=11 // pred_region
          %s369 = ssub.s32 4096, 4096
          %370 = vsyncadd [#allocation9], %s369
          %s371 = sshll.u32 [#allocation8], 4
          %s372 = int_to_ptr.vmem [resolvable:$true] %s371
          %377 = dma.hbm_to_vmem [thread:$0]  %s4, 4096, %s372, [#allocation9], 128, 128, 8
        $region28: #{tpu_custom_call.1} parent=11 // pred_fallthru
          _
      $region12: #{tpu_custom_call.1} parent=5 // pred_fallthru
        _
      %p378 = scmp.lt.s32.totalorder %s29, 4
      // Predicated region
      $region29: #{tpu_custom_call.1} parent=5 // pred_check
        %p379 = pneg %p378
      $region30: #{tpu_custom_call.1} parent=5 // pred_check_branch
        %381 = sbr.rel (%p379) target = $region32
      $region31: #{tpu_custom_call.1} parent=5 // pred_region
        // Predicated region
        $region33: #{tpu_custom_call.1} parent=31 // pred_check
          %p382 = pneg %p49
        $region34: #{tpu_custom_call.1} parent=31 // pred_check_branch
          %384 = sbr.rel (%p382) target = $region36
        $region35: #{tpu_custom_call.1} parent=31 // pred_region
          %s385 = sand.u32 %s29, 1
          %s386 = scalar_lea.sflag [#allocation3], %s385
          %s387 = sand.u32 %s39, 1
          %s388 = smul.addr %s387, 128
          %s389 = scalar_lea.vmem [#allocation2], %s388
          %s390 = smul.u32 8, %s29
          %s392 = ssub.s32 2048, 2048
          %393 = vsyncadd %s386, %s392
          %s394 = smul.addr %s390, 2
          %s395 = smul.addr %s394, 128
          %s396 = scalar_lea.hbm %s0, %s395
          %s397 = sshll.u32 %s389, 4
          %s398 = int_to_ptr.vmem [resolvable:$true] %s397
          %403 = dma.hbm_to_vmem [thread:$0]  %s396, 2048, %s398, %s386, 256, 256, 16
        $region36: #{tpu_custom_call.1} parent=31 // pred_fallthru
          _
        // Predicated region
        $region37: #{tpu_custom_call.1} parent=31 // pred_check
          %p404 = pneg %p159
        $region38: #{tpu_custom_call.1} parent=31 // pred_check_branch
          %406 = sbr.rel (%p404) target = $region40
        $region39: #{tpu_custom_call.1} parent=31 // pred_region
          %s407 = sand.u32 %s29, 1
          %s408 = scalar_lea.sflag [#allocation3], %s407
          %s409 = sand.u32 %s149, 1
          %s410 = smul.addr %s409, 256
          %s411 = scalar_lea.vmem [#allocation10], %s410
          %s412 = smul.u32 8, %s29
          %s414 = ssub.s32 4096, 4096
          %415 = vsyncadd %s408, %s414
          %s416 = smul.addr %s412, 4
          %s417 = smul.addr %s416, 128
          %s418 = scalar_lea.hbm %s5, %s417
          %s419 = sshll.u32 %s411, 4
          %s420 = int_to_ptr.vmem [resolvable:$true] %s419
          %425 = dma.hbm_to_vmem [thread:$0]  %s418, 4096, %s420, %s408, 512, 512, 32
        $region40: #{tpu_custom_call.1} parent=31 // pred_fallthru
          _
        // Predicated region
        $region41: #{tpu_custom_call.1} parent=31 // pred_check
          %p426 = pneg %p185
        $region42: #{tpu_custom_call.1} parent=31 // pred_check_branch
          %428 = sbr.rel (%p426) target = $region44
        $region43: #{tpu_custom_call.1} parent=31 // pred_region
          %s429 = sand.u32 %s29, 1
          %s430 = scalar_lea.sflag [#allocation3], %s429
          %s431 = sand.u32 %s175, 1
          %s432 = smul.addr %s431, 256
          %s433 = scalar_lea.vmem [#allocation11], %s432
          %s434 = smul.u32 8, %s29
          %s436 = ssub.s32 4096, 4096
          %437 = vsyncadd %s430, %s436
          %s438 = smul.addr %s434, 4
          %s439 = smul.addr %s438, 128
          %s440 = scalar_lea.hbm %s6, %s439
          %s441 = sshll.u32 %s433, 4
          %s442 = int_to_ptr.vmem [resolvable:$true] %s441
          %447 = dma.hbm_to_vmem [thread:$0]  %s440, 4096, %s442, %s430, 512, 512, 32
        $region44: #{tpu_custom_call.1} parent=31 // pred_fallthru
          _
        // Predicated region
        $region45: #{tpu_custom_call.1} parent=31 // pred_check
          %p448 = pneg %p211
        $region46: #{tpu_custom_call.1} parent=31 // pred_check_branch
          %450 = sbr.rel (%p448) target = $region48
        $region47: #{tpu_custom_call.1} parent=31 // pred_region
          %s451 = sand.u32 %s29, 1
          %s452 = scalar_lea.sflag [#allocation3], %s451
          %s453 = sand.u32 %s201, 1
          %s454 = smul.addr %s453, 128
          %s455 = scalar_lea.vmem [#allocation12], %s454
          %s456 = smul.u32 8, %s29
          %s458 = ssub.s32 2048, 2048
          %459 = vsyncadd %s452, %s458
          %s460 = smul.addr %s456, 2
          %s461 = smul.addr %s460, 128
          %s462 = scalar_lea.hbm %s7, %s461
          %s463 = sshll.u32 %s455, 4
          %s464 = int_to_ptr.vmem [resolvable:$true] %s463
          %469 = dma.hbm_to_vmem [thread:$0]  %s462, 2048, %s464, %s452, 256, 256, 16
        $region48: #{tpu_custom_call.1} parent=31 // pred_fallthru
          _
        // Predicated region
        $region49: #{tpu_custom_call.1} parent=31 // pred_check
          %p470 = pneg %p237
        $region50: #{tpu_custom_call.1} parent=31 // pred_check_branch
          %472 = sbr.rel (%p470) target = $region52
        $region51: #{tpu_custom_call.1} parent=31 // pred_region
          %s473 = sand.u32 %s29, 1
          %s474 = scalar_lea.sflag [#allocation3], %s473
          %s475 = sand.u32 %s227, 1
          %s476 = smul.addr %s475, 128
          %s477 = scalar_lea.vmem [#allocation13], %s476
          %s478 = smul.u32 8, %s29
          %s480 = ssub.s32 2048, 2048
          %481 = vsyncadd %s474, %s480
          %s482 = smul.addr %s478, 2
          %s483 = smul.addr %s482, 128
          %s484 = scalar_lea.hbm %s8, %s483
          %s485 = sshll.u32 %s477, 4
          %s486 = int_to_ptr.vmem [resolvable:$true] %s485
          %491 = dma.hbm_to_vmem [thread:$0]  %s484, 2048, %s486, %s474, 256, 256, 16
        $region52: #{tpu_custom_call.1} parent=31 // pred_fallthru
          _
      $region32: #{tpu_custom_call.1} parent=5 // pred_fallthru
        _
      %p492 = scmp.le.s32.totalorder 1, %s29
      %p493 = scmp.lt.s32.totalorder %s29, 5
      %p494 = pnand %p492, %p493
      %p495 = pneg %p494
      // Predicated region
      $region53: #{tpu_custom_call.1} parent=5 // pred_check
        _
      $region54: #{tpu_custom_call.1} parent=5 // pred_check_branch
        %497 = sbr.rel (%p494) target = $region56
      $region55: #{tpu_custom_call.1} parent=5 // pred_region
        %s498 = ssub.s32 %s29, 1
        %s499 = sand.u32 %s34, 1
        %s500 = scalar_lea.sflag [#allocation3], %s499
        %s501 = sand.u32 %s42, 1
        %s502 = smul.addr %s501, 128
        %s503 = scalar_lea.vmem [#allocation2], %s502
        // Predicated region
        $region57: #{tpu_custom_call.1} parent=55 // pred_check
          %p504 = pneg %p55
        $region58: #{tpu_custom_call.1} parent=55 // pred_check_branch
          %506 = sbr.rel (%p504) target = $region60
        $region59: #{tpu_custom_call.1} parent=55 // pred_region
          %507 = dma.done %s500, 2048
        $region60: #{tpu_custom_call.1} parent=55 // pred_fallthru
          _
        // Predicated region
        $region61: #{tpu_custom_call.1} parent=55 // pred_check
          %p508 = pneg %p97
        $region62: #{tpu_custom_call.1} parent=55 // pred_check_branch
          %510 = sbr.rel (%p508) target = $region64
        $region63: #{tpu_custom_call.1} parent=55 // pred_region
          %511 = dma.done [#allocation6], 8192
        $region64: #{tpu_custom_call.1} parent=55 // pred_fallthru
          _
        // Predicated region
        $region65: #{tpu_custom_call.1} parent=55 // pred_check
          %p512 = pneg %p118
        $region66: #{tpu_custom_call.1} parent=55 // pred_check_branch
          %514 = sbr.rel (%p512) target = $region68
        $region67: #{tpu_custom_call.1} parent=55 // pred_region
          %515 = dma.done [#allocation6], 4096
        $region68: #{tpu_custom_call.1} parent=55 // pred_fallthru
          _
        // Predicated region
        $region69: #{tpu_custom_call.1} parent=55 // pred_check
          %p516 = pneg %p139
        $region70: #{tpu_custom_call.1} parent=55 // pred_check_branch
          %518 = sbr.rel (%p516) target = $region72
        $region71: #{tpu_custom_call.1} parent=55 // pred_region
          %519 = dma.done [#allocation9], 4096
        $region72: #{tpu_custom_call.1} parent=55 // pred_fallthru
          _
        %s520 = sand.u32 %s34, 1
        %s521 = scalar_lea.sflag [#allocation3], %s520
        %s522 = sand.u32 %s152, 1
        %s523 = smul.addr %s522, 256
        %s524 = scalar_lea.vmem [#allocation10], %s523
        // Predicated region
        $region73: #{tpu_custom_call.1} parent=55 // pred_check
          %p525 = pneg %p165
        $region74: #{tpu_custom_call.1} parent=55 // pred_check_branch
          %527 = sbr.rel (%p525) target = $region76
        $region75: #{tpu_custom_call.1} parent=55 // pred_region
          %528 = dma.done %s521, 4096
        $region76: #{tpu_custom_call.1} parent=55 // pred_fallthru
          _
        %s529 = sand.u32 %s34, 1
        %s530 = scalar_lea.sflag [#allocation3], %s529
        %s531 = sand.u32 %s178, 1
        %s532 = smul.addr %s531, 256
        %s533 = scalar_lea.vmem [#allocation11], %s532
        // Predicated region
        $region77: #{tpu_custom_call.1} parent=55 // pred_check
          %p534 = pneg %p191
        $region78: #{tpu_custom_call.1} parent=55 // pred_check_branch
          %536 = sbr.rel (%p534) target = $region80
        $region79: #{tpu_custom_call.1} parent=55 // pred_region
          %537 = dma.done %s530, 4096
        $region80: #{tpu_custom_call.1} parent=55 // pred_fallthru
          _
        %s538 = sand.u32 %s34, 1
        %s539 = scalar_lea.sflag [#allocation3], %s538
        %s540 = sand.u32 %s204, 1
        %s541 = smul.addr %s540, 128
        %s542 = scalar_lea.vmem [#allocation12], %s541
        // Predicated region
        $region81: #{tpu_custom_call.1} parent=55 // pred_check
          %p543 = pneg %p217
        $region82: #{tpu_custom_call.1} parent=55 // pred_check_branch
          %545 = sbr.rel (%p543) target = $region84
        $region83: #{tpu_custom_call.1} parent=55 // pred_region
          %546 = dma.done %s539, 2048
        $region84: #{tpu_custom_call.1} parent=55 // pred_fallthru
          _
        %s547 = sand.u32 %s34, 1
        %s548 = scalar_lea.sflag [#allocation3], %s547
        %s549 = sand.u32 %s230, 1
        %s550 = smul.addr %s549, 128
        %s551 = scalar_lea.vmem [#allocation13], %s550
        // Predicated region
        $region85: #{tpu_custom_call.1} parent=55 // pred_check
          %p552 = pneg %p243
        $region86: #{tpu_custom_call.1} parent=55 // pred_check_branch
          %554 = sbr.rel (%p552) target = $region88
        $region87: #{tpu_custom_call.1} parent=55 // pred_region
          %555 = dma.done %s548, 2048
        $region88: #{tpu_custom_call.1} parent=55 // pred_fallthru
          _
        %s556 = sand.u32 %s34, 1
        %s557 = scalar_lea.sflag [#allocation3], %s556
        %s558 = sand.u32 %s42, 1
        %s559 = smul.addr %s558, 128
        %s560 = scalar_lea.vmem [#allocation2], %s559
        %p561 = pneg %p55
        %p562 = pneg %p52
        %p563 = pneg %p76
        %p564 = pneg %p73
        %p565 = pneg %p97
        %p566 = pneg %p94
        %p567 = pneg %p118
        %p568 = pneg %p115
        %p569 = pneg %p139
        %p570 = pneg %p136
        %s571 = sand.u32 %s34, 1
        %s572 = scalar_lea.sflag [#allocation3], %s571
        %s573 = sand.u32 %s152, 1
        %s574 = smul.addr %s573, 256
        %s575 = scalar_lea.vmem [#allocation10], %s574
        %p576 = pneg %p165
        %p577 = pneg %p162
        %s578 = sand.u32 %s34, 1
        %s579 = scalar_lea.sflag [#allocation3], %s578
        %s580 = sand.u32 %s178, 1
        %s581 = smul.addr %s580, 256
        %s582 = scalar_lea.vmem [#allocation11], %s581
        %p583 = pneg %p191
        %p584 = pneg %p188
        %s585 = sand.u32 %s34, 1
        %s586 = scalar_lea.sflag [#allocation3], %s585
        %s587 = sand.u32 %s204, 1
        %s588 = smul.addr %s587, 128
        %s589 = scalar_lea.vmem [#allocation12], %s588
        %p590 = pneg %p217
        %p591 = pneg %p214
        %s592 = sand.u32 %s34, 1
        %s593 = scalar_lea.sflag [#allocation3], %s592
        %s594 = sand.u32 %s230, 1
        %s595 = smul.addr %s594, 128
        %s596 = scalar_lea.vmem [#allocation13], %s595
        %p597 = pneg %p243
        %p598 = pneg %p240
        %p599 = pneg %p269
        %p600 = pneg %p266
        %s601 = sand.u32 %s256, 1
        %s602 = scalar_lea.sflag [#allocation4], %s601
        %s603 = sand.u32 %s256, 1
        %s604 = smul.addr %s603, 128
        %s605 = scalar_lea.vmem [#allocation14], %s604
        %p606 = pneg %p295
        %p607 = pneg %p292
        %s608 = sand.u32 %s34, 1
        %s609 = scalar_lea.sflag [#allocation16], %s608
        %s610 = sand.u32 %s282, 1
        %s611 = smul.addr %s610, 64
        %s612 = scalar_lea.vmem [#allocation15], %s611
        %p613 = pneg %p321
        %p614 = pneg %p318
        %s615 = sand.u32 %s34, 1
        %s616 = scalar_lea.sflag [#allocation16], %s615
        %s617 = sand.u32 %s308, 1
        %s618 = smul.addr %s617, 64
        %s619 = scalar_lea.vmem [#allocation17], %s618
        %s620 = smul.u32 8, %s34
        %s621 = smul.u32 8, %s34
        %s622 = smul.u32 8, %s34
        %s623 = smul.u32 8, %s34
        %s624 = smul.u32 8, %s34
        %s625 = smul.u32 8, %s34
        %s626 = smul.u32 8, %s34
        %s627 = smul.u32 8, %s34
        %v628 = vld [vmem:[%s503] sm:$0xff]
        %v629 = vld [vmem:[%s503 + $0x8] sm:$0xff]
        %v630 = vld [vmem:[%s503 + $0x10] sm:$0xff]
        %v631 = vld [vmem:[%s503 + $0x18] sm:$0xff]
        %v632 = vld [vmem:[%s503 + $0x20] sm:$0xff]
        %v633 = vld [vmem:[%s503 + $0x28] sm:$0xff]
        %v634 = vld [vmem:[%s503 + $0x30] sm:$0xff]
        %v635 = vld [vmem:[%s503 + $0x38] sm:$0xff]
        %v636 = vld [vmem:[%s503 + $0x40] sm:$0xff]
        %v637 = vld [vmem:[%s503 + $0x48] sm:$0xff]
        %v638 = vld [vmem:[%s503 + $0x50] sm:$0xff]
        %v639 = vld [vmem:[%s503 + $0x58] sm:$0xff]
        %v640 = vld [vmem:[%s503 + $0x60] sm:$0xff]
        %v641 = vld [vmem:[%s503 + $0x68] sm:$0xff]
        %v642 = vld [vmem:[%s503 + $0x70] sm:$0xff]
        %v643 = vld [vmem:[%s503 + $0x78] sm:$0xff]
        %v644 = vmul.f32 %v628, %v628
        %v645 = vmul.f32 %v629, %v629
        %v646 = vmul.f32 %v630, %v630
        %v647 = vmul.f32 %v631, %v631
        %v648 = vmul.f32 %v632, %v632
        %v649 = vmul.f32 %v633, %v633
        %v650 = vmul.f32 %v634, %v634
        %v651 = vmul.f32 %v635, %v635
        %v652 = vmul.f32 %v636, %v636
        %v653 = vmul.f32 %v637, %v637
        %v654 = vmul.f32 %v638, %v638
        %v655 = vmul.f32 %v639, %v639
        %v656 = vmul.f32 %v640, %v640
        %v657 = vmul.f32 %v641, %v641
        %v658 = vmul.f32 %v642, %v642
        %v659 = vmul.f32 %v643, %v643
        %v660 = vadd.f32 %v644, %v645
        %661 = vadd.xlane.f32.xlu0 %v660
        %v662 = vpop.xlane.xlu0 %661
        %v663 = vadd.f32 %v646, %v647
        %664 = vadd.xlane.f32.xlu0 %v663
        %v665 = vpop.xlane.xlu0 %664
        %v666 = vadd.f32 %v648, %v649
        %667 = vadd.xlane.f32.xlu0 %v666
        %v668 = vpop.xlane.xlu0 %667
        %v669 = vadd.f32 %v650, %v651
        %670 = vadd.xlane.f32.xlu0 %v669
        %v671 = vpop.xlane.xlu0 %670
        %v672 = vadd.f32 %v652, %v653
        %673 = vadd.xlane.f32.xlu0 %v672
        %v674 = vpop.xlane.xlu0 %673
        %v675 = vadd.f32 %v654, %v655
        %676 = vadd.xlane.f32.xlu0 %v675
        %v677 = vpop.xlane.xlu0 %676
        %v678 = vadd.f32 %v656, %v657
        %679 = vadd.xlane.f32.xlu0 %v678
        %v680 = vpop.xlane.xlu0 %679
        %v681 = vadd.f32 %v658, %v659
        %682 = vadd.xlane.f32.xlu0 %v681
        %v683 = vpop.xlane.xlu0 %682
        %v684 = vrcp.pop 256.0
        %v685 = vmul.f32 %v662, %v684
        %v686 = vmul.f32 %v665, %v684
        %v687 = vmul.f32 %v668, %v684
        %v688 = vmul.f32 %v671, %v684
        %v689 = vmul.f32 %v674, %v684
        %v690 = vmul.f32 %v677, %v684
        %v691 = vmul.f32 %v680, %v684
        %v692 = vmul.f32 %v683, %v684
        %v693 = vadd.f32 %v685, 1e-05
        %v694 = vadd.f32 %v686, 1e-05
        %v695 = vadd.f32 %v687, 1e-05
        %v696 = vadd.f32 %v688, 1e-05
        %v697 = vadd.f32 %v689, 1e-05
        %v698 = vadd.f32 %v690, 1e-05
        %v699 = vadd.f32 %v691, 1e-05
        %v700 = vadd.f32 %v692, 1e-05
        %v701 = vrsqrt.pop %v693
        %v702 = vrsqrt.pop %v694
        %v703 = vrsqrt.pop %v695
        %v704 = vrsqrt.pop %v696
        %v705 = vrsqrt.pop %v697
        %v706 = vrsqrt.pop %v698
        %v707 = vrsqrt.pop %v699
        %v708 = vrsqrt.pop %v700
        %v709 = vmul.f32 %v628, %v701
        %v710 = vmul.f32 %v629, %v701
        %v711 = vmul.f32 %v630, %v702
        %v712 = vmul.f32 %v631, %v702
        %v713 = vmul.f32 %v632, %v703
        %v714 = vmul.f32 %v633, %v703
        %v715 = vmul.f32 %v634, %v704
        %v716 = vmul.f32 %v635, %v704
        %v717 = vmul.f32 %v636, %v705
        %v718 = vmul.f32 %v637, %v705
        %v719 = vmul.f32 %v638, %v706
        %v720 = vmul.f32 %v639, %v706
        %v721 = vmul.f32 %v640, %v707
        %v722 = vmul.f32 %v641, %v707
        %v723 = vmul.f32 %v642, %v708
        %v724 = vmul.f32 %v643, %v708
        %v725 = vld [vmem:[%s1] sm:$0x3]
        %v727 = vlaneseq
        %v728 = vshrl.u32 %v727, 7
        %v729 = vsub.s32 0, %v728
        %v730 = vrot.slane %v725, %v729
        %v731 = vlaneseq
        %v732 = vshrl.u32 %v731, 7
        %v733 = vsub.s32 1, %v732
        %v734 = vrot.slane %v725, %v733
        %v737 = vmul.f32 %v709, %v730
        %v738 = vmul.f32 %v710, %v734
        %v739 = vmul.f32 %v711, %v730
        %v740 = vmul.f32 %v712, %v734
        %v741 = vmul.f32 %v713, %v730
        %v742 = vmul.f32 %v714, %v734
        %v743 = vmul.f32 %v715, %v730
        %v744 = vmul.f32 %v716, %v734
        %v745 = vmul.f32 %v717, %v730
        %v746 = vmul.f32 %v718, %v734
        %v747 = vmul.f32 %v719, %v730
        %v748 = vmul.f32 %v720, %v734
        %v749 = vmul.f32 %v721, %v730
        %v750 = vmul.f32 %v722, %v734
        %v751 = vmul.f32 %v723, %v730
        %v752 = vmul.f32 %v724, %v734
        %v753 = vpack.c.bf16 %v739, %v737
        %v754 = vpack.c.bf16 %v740, %v738
        %v755 = vpack.c.bf16 %v743, %v741
        %v756 = vpack.c.bf16 %v744, %v742
        %v757 = vpack.c.bf16 %v747, %v745
        %v758 = vpack.c.bf16 %v748, %v746
        %v759 = vpack.c.bf16 %v751, %v749
        %v760 = vpack.c.bf16 %v752, %v750
        %v761 = vld [vmem:[#allocation5] sm:$0xff]
        %v762 = vld [vmem:[#allocation5 + $0x8] sm:$0xff]
        %v763 = vld [vmem:[#allocation5 + $0x10] sm:$0xff]
        %v764 = vld [vmem:[#allocation5 + $0x18] sm:$0xff]
        %v765 = vld [vmem:[#allocation5 + $0x20] sm:$0xff]
        %v766 = vld [vmem:[#allocation5 + $0x28] sm:$0xff]
        %v767 = vld [vmem:[#allocation5 + $0x30] sm:$0xff]
        %v768 = vld [vmem:[#allocation5 + $0x38] sm:$0xff]
        %v769 = vld [vmem:[#allocation5 + $0x40] sm:$0xff]
        %v770 = vld [vmem:[#allocation5 + $0x48] sm:$0xff]
        %v771 = vld [vmem:[#allocation5 + $0x50] sm:$0xff]
        %v772 = vld [vmem:[#allocation5 + $0x58] sm:$0xff]
        %v773 = vld [vmem:[#allocation5 + $0x60] sm:$0xff]
        %v774 = vld [vmem:[#allocation5 + $0x68] sm:$0xff]
        %v775 = vld [vmem:[#allocation5 + $0x70] sm:$0xff]
        %v776 = vld [vmem:[#allocation5 + $0x78] sm:$0xff]
        %v777 = vld [vmem:[#allocation5 + $0x80] sm:$0xff]
        %v778 = vld [vmem:[#allocation5 + $0x88] sm:$0xff]
        %v779 = vld [vmem:[#allocation5 + $0x90] sm:$0xff]
        %v780 = vld [vmem:[#allocation5 + $0x98] sm:$0xff]
        %v781 = vld [vmem:[#allocation5 + $0xa0] sm:$0xff]
        %v782 = vld [vmem:[#allocation5 + $0xa8] sm:$0xff]
        %v783 = vld [vmem:[#allocation5 + $0xb0] sm:$0xff]
        %v784 = vld [vmem:[#allocation5 + $0xb8] sm:$0xff]
        %v785 = vld [vmem:[#allocation5 + $0xc0] sm:$0xff]
        %v786 = vld [vmem:[#allocation5 + $0xc8] sm:$0xff]
        %v787 = vld [vmem:[#allocation5 + $0xd0] sm:$0xff]
        %v788 = vld [vmem:[#allocation5 + $0xd8] sm:$0xff]
        %v789 = vld [vmem:[#allocation5 + $0xe0] sm:$0xff]
        %v790 = vld [vmem:[#allocation5 + $0xe8] sm:$0xff]
        %v791 = vld [vmem:[#allocation5 + $0xf0] sm:$0xff]
        %v792 = vld [vmem:[#allocation5 + $0xf8] sm:$0xff]
        %v793 = vld [vmem:[#allocation5 + $0x100] sm:$0xff]
        %v794 = vld [vmem:[#allocation5 + $0x108] sm:$0xff]
        %v795 = vld [vmem:[#allocation5 + $0x110] sm:$0xff]
        %v796 = vld [vmem:[#allocation5 + $0x118] sm:$0xff]
        %v797 = vld [vmem:[#allocation5 + $0x120] sm:$0xff]
        %v798 = vld [vmem:[#allocation5 + $0x128] sm:$0xff]
        %v799 = vld [vmem:[#allocation5 + $0x130] sm:$0xff]
        %v800 = vld [vmem:[#allocation5 + $0x138] sm:$0xff]
        %v801 = vld [vmem:[#allocation5 + $0x140] sm:$0xff]
        %v802 = vld [vmem:[#allocation5 + $0x148] sm:$0xff]
        %v803 = vld [vmem:[#allocation5 + $0x150] sm:$0xff]
        %v804 = vld [vmem:[#allocation5 + $0x158] sm:$0xff]
        %v805 = vld [vmem:[#allocation5 + $0x160] sm:$0xff]
        %v806 = vld [vmem:[#allocation5 + $0x168] sm:$0xff]
        %v807 = vld [vmem:[#allocation5 + $0x170] sm:$0xff]
        %v808 = vld [vmem:[#allocation5 + $0x178] sm:$0xff]
        %v809 = vld [vmem:[#allocation5 + $0x180] sm:$0xff]
        %v810 = vld [vmem:[#allocation5 + $0x188] sm:$0xff]
        %v811 = vld [vmem:[#allocation5 + $0x190] sm:$0xff]
        %v812 = vld [vmem:[#allocation5 + $0x198] sm:$0xff]
        %v813 = vld [vmem:[#allocation5 + $0x1a0] sm:$0xff]
        %v814 = vld [vmem:[#allocation5 + $0x1a8] sm:$0xff]
        %v815 = vld [vmem:[#allocation5 + $0x1b0] sm:$0xff]
        %v816 = vld [vmem:[#allocation5 + $0x1b8] sm:$0xff]
        %v817 = vld [vmem:[#allocation5 + $0x1c0] sm:$0xff]
        %v818 = vld [vmem:[#allocation5 + $0x1c8] sm:$0xff]
        %v819 = vld [vmem:[#allocation5 + $0x1d0] sm:$0xff]
        %v820 = vld [vmem:[#allocation5 + $0x1d8] sm:$0xff]
        %v821 = vld [vmem:[#allocation5 + $0x1e0] sm:$0xff]
        %v822 = vld [vmem:[#allocation5 + $0x1e8] sm:$0xff]
        %v823 = vld [vmem:[#allocation5 + $0x1f0] sm:$0xff]
        %v824 = vld [vmem:[#allocation5 + $0x1f8] sm:$0xff]
        %v889 = vunpack.c.l.b16 %v761
        %v890 = vunpack.c.h.b16 %v761
        %v891 = vunpack.c.l.b16 %v762
        %v892 = vunpack.c.h.b16 %v762
        %v893 = vunpack.c.l.b16 %v763
        %v894 = vunpack.c.h.b16 %v763
        %v895 = vunpack.c.l.b16 %v764
        %v896 = vunpack.c.h.b16 %v764
        %v897 = vunpack.c.l.b16 %v765
        %v898 = vunpack.c.h.b16 %v765
        %v899 = vunpack.c.l.b16 %v766
        %v900 = vunpack.c.h.b16 %v766
        %v901 = vunpack.c.l.b16 %v767
        %v902 = vunpack.c.h.b16 %v767
        %v903 = vunpack.c.l.b16 %v768
        %v904 = vunpack.c.h.b16 %v768
        %v905 = vunpack.c.l.b16 %v769
        %v906 = vunpack.c.h.b16 %v769
        %v907 = vunpack.c.l.b16 %v770
        %v908 = vunpack.c.h.b16 %v770
        %v909 = vunpack.c.l.b16 %v771
        %v910 = vunpack.c.h.b16 %v771
        %v911 = vunpack.c.l.b16 %v772
        %v912 = vunpack.c.h.b16 %v772
        %v913 = vunpack.c.l.b16 %v773
        %v914 = vunpack.c.h.b16 %v773
        %v915 = vunpack.c.l.b16 %v774
        %v916 = vunpack.c.h.b16 %v774
        %v917 = vunpack.c.l.b16 %v775
        %v918 = vunpack.c.h.b16 %v775
        %v919 = vunpack.c.l.b16 %v776
        %v920 = vunpack.c.h.b16 %v776
        %v921 = vunpack.c.l.b16 %v777
        %v922 = vunpack.c.h.b16 %v777
        %v923 = vunpack.c.l.b16 %v778
        %v924 = vunpack.c.h.b16 %v778
        %v925 = vunpack.c.l.b16 %v779
        %v926 = vunpack.c.h.b16 %v779
        %v927 = vunpack.c.l.b16 %v780
        %v928 = vunpack.c.h.b16 %v780
        %v929 = vunpack.c.l.b16 %v781
        %v930 = vunpack.c.h.b16 %v781
        %v931 = vunpack.c.l.b16 %v782
        %v932 = vunpack.c.h.b16 %v782
        %v933 = vunpack.c.l.b16 %v783
        %v934 = vunpack.c.h.b16 %v783
        %v935 = vunpack.c.l.b16 %v784
        %v936 = vunpack.c.h.b16 %v784
        %v937 = vunpack.c.l.b16 %v785
        %v938 = vunpack.c.h.b16 %v785
        %v939 = vunpack.c.l.b16 %v786
        %v940 = vunpack.c.h.b16 %v786
        %v941 = vunpack.c.l.b16 %v787
        %v942 = vunpack.c.h.b16 %v787
        %v943 = vunpack.c.l.b16 %v788
        %v944 = vunpack.c.h.b16 %v788
        %v945 = vunpack.c.l.b16 %v789
        %v946 = vunpack.c.h.b16 %v789
        %v947 = vunpack.c.l.b16 %v790
        %v948 = vunpack.c.h.b16 %v790
        %v949 = vunpack.c.l.b16 %v791
        %v950 = vunpack.c.h.b16 %v791
        %v951 = vunpack.c.l.b16 %v792
        %v952 = vunpack.c.h.b16 %v792
        %v953 = vunpack.c.l.b16 %v793
        %v954 = vunpack.c.h.b16 %v793
        %v955 = vunpack.c.l.b16 %v794
        %v956 = vunpack.c.h.b16 %v794
        %v957 = vunpack.c.l.b16 %v795
        %v958 = vunpack.c.h.b16 %v795
        %v959 = vunpack.c.l.b16 %v796
        %v960 = vunpack.c.h.b16 %v796
        %v961 = vunpack.c.l.b16 %v797
        %v962 = vunpack.c.h.b16 %v797
        %v963 = vunpack.c.l.b16 %v798
        %v964 = vunpack.c.h.b16 %v798
        %v965 = vunpack.c.l.b16 %v799
        %v966 = vunpack.c.h.b16 %v799
        %v967 = vunpack.c.l.b16 %v800
        %v968 = vunpack.c.h.b16 %v800
        %v969 = vunpack.c.l.b16 %v801
        %v970 = vunpack.c.h.b16 %v801
        %v971 = vunpack.c.l.b16 %v802
        %v972 = vunpack.c.h.b16 %v802
        %v973 = vunpack.c.l.b16 %v803
        %v974 = vunpack.c.h.b16 %v803
        %v975 = vunpack.c.l.b16 %v804
        %v976 = vunpack.c.h.b16 %v804
        %v977 = vunpack.c.l.b16 %v805
        %v978 = vunpack.c.h.b16 %v805
        %v979 = vunpack.c.l.b16 %v806
        %v980 = vunpack.c.h.b16 %v806
        %v981 = vunpack.c.l.b16 %v807
        %v982 = vunpack.c.h.b16 %v807
        %v983 = vunpack.c.l.b16 %v808
        %v984 = vunpack.c.h.b16 %v808
        %v985 = vunpack.c.l.b16 %v809
        %v986 = vunpack.c.h.b16 %v809
        %v987 = vunpack.c.l.b16 %v810
        %v988 = vunpack.c.h.b16 %v810
        %v989 = vunpack.c.l.b16 %v811
        %v990 = vunpack.c.h.b16 %v811
        %v991 = vunpack.c.l.b16 %v812
        %v992 = vunpack.c.h.b16 %v812
        %v993 = vunpack.c.l.b16 %v813
        %v994 = vunpack.c.h.b16 %v813
        %v995 = vunpack.c.l.b16 %v814
        %v996 = vunpack.c.h.b16 %v814
        %v997 = vunpack.c.l.b16 %v815
        %v998 = vunpack.c.h.b16 %v815
        %v999 = vunpack.c.l.b16 %v816
        %v1000 = vunpack.c.h.b16 %v816
        %v1001 = vunpack.c.l.b16 %v817
        %v1002 = vunpack.c.h.b16 %v817
        %v1003 = vunpack.c.l.b16 %v818
        %v1004 = vunpack.c.h.b16 %v818
        %v1005 = vunpack.c.l.b16 %v819
        %v1006 = vunpack.c.h.b16 %v819
        %v1007 = vunpack.c.l.b16 %v820
        %v1008 = vunpack.c.h.b16 %v820
        %v1009 = vunpack.c.l.b16 %v821
        %v1010 = vunpack.c.h.b16 %v821
        %v1011 = vunpack.c.l.b16 %v822
        %v1012 = vunpack.c.h.b16 %v822
        %v1013 = vunpack.c.l.b16 %v823
        %v1014 = vunpack.c.h.b16 %v823
        %v1015 = vunpack.c.l.b16 %v824
        %v1016 = vunpack.c.h.b16 %v824
        %v1017 = vpack.c.b16 %v893, %v889
        %v1018 = vpack.c.b16 %v894, %v890
        %v1019 = vpack.c.b16 %v895, %v891
        %v1020 = vpack.c.b16 %v896, %v892
        %v1021 = vpack.c.b16 %v901, %v897
        %v1022 = vpack.c.b16 %v902, %v898
        %v1023 = vpack.c.b16 %v903, %v899
        %v1024 = vpack.c.b16 %v904, %v900
        %v1025 = vpack.c.b16 %v909, %v905
        %v1026 = vpack.c.b16 %v910, %v906
        %v1027 = vpack.c.b16 %v911, %v907
        %v1028 = vpack.c.b16 %v912, %v908
        %v1029 = vpack.c.b16 %v917, %v913
        %v1030 = vpack.c.b16 %v918, %v914
        %v1031 = vpack.c.b16 %v919, %v915
        %v1032 = vpack.c.b16 %v920, %v916
        %v1033 = vpack.c.b16 %v925, %v921
        %v1034 = vpack.c.b16 %v926, %v922
        %v1035 = vpack.c.b16 %v927, %v923
        %v1036 = vpack.c.b16 %v928, %v924
        %v1037 = vpack.c.b16 %v933, %v929
        %v1038 = vpack.c.b16 %v934, %v930
        %v1039 = vpack.c.b16 %v935, %v931
        %v1040 = vpack.c.b16 %v936, %v932
        %v1041 = vpack.c.b16 %v941, %v937
        %v1042 = vpack.c.b16 %v942, %v938
        %v1043 = vpack.c.b16 %v943, %v939
        %v1044 = vpack.c.b16 %v944, %v940
        %v1045 = vpack.c.b16 %v949, %v945
        %v1046 = vpack.c.b16 %v950, %v946
        %v1047 = vpack.c.b16 %v951, %v947
        %v1048 = vpack.c.b16 %v952, %v948
        %v1049 = vpack.c.b16 %v957, %v953
        %v1050 = vpack.c.b16 %v958, %v954
        %v1051 = vpack.c.b16 %v959, %v955
        %v1052 = vpack.c.b16 %v960, %v956
        %v1053 = vpack.c.b16 %v965, %v961
        %v1054 = vpack.c.b16 %v966, %v962
        %v1055 = vpack.c.b16 %v967, %v963
        %v1056 = vpack.c.b16 %v968, %v964
        %v1057 = vpack.c.b16 %v973, %v969
        %v1058 = vpack.c.b16 %v974, %v970
        %v1059 = vpack.c.b16 %v975, %v971
        %v1060 = vpack.c.b16 %v976, %v972
        %v1061 = vpack.c.b16 %v981, %v977
        %v1062 = vpack.c.b16 %v982, %v978
        %v1063 = vpack.c.b16 %v983, %v979
        %v1064 = vpack.c.b16 %v984, %v980
        %v1065 = vpack.c.b16 %v989, %v985
        %v1066 = vpack.c.b16 %v990, %v986
        %v1067 = vpack.c.b16 %v991, %v987
        %v1068 = vpack.c.b16 %v992, %v988
        %v1069 = vpack.c.b16 %v997, %v993
        %v1070 = vpack.c.b16 %v998, %v994
        %v1071 = vpack.c.b16 %v999, %v995
        %v1072 = vpack.c.b16 %v1000, %v996
        %v1073 = vpack.c.b16 %v1005, %v1001
        %v1074 = vpack.c.b16 %v1006, %v1002
        %v1075 = vpack.c.b16 %v1007, %v1003
        %v1076 = vpack.c.b16 %v1008, %v1004
        %v1077 = vpack.c.b16 %v1013, %v1009
        %v1078 = vpack.c.b16 %v1014, %v1010
        %v1079 = vpack.c.b16 %v1015, %v1011
        %v1080 = vpack.c.b16 %v1016, %v1012
        %1145 = vmatprep.subr.bf16.mxu0 %v1018
        %1146 = vmatpush1.bf16.msra.mxu0 %v1017
        %1147 = vmatprep.subr.bf16.mxu0 %v1022
        %1148 = vmatpush1.bf16.msra.mxu0 %v1021
        %1149 = vmatprep.subr.bf16.mxu0 %v1026
        %1150 = vmatpush1.bf16.msra.mxu0 %v1025
        %1151 = vmatprep.subr.bf16.mxu0 %v1030
        %1152 = vmatpush1.bf16.msra.mxu0 %v1029
        %1153 = vmatprep.subr.bf16.mxu0 %v1034
        %1154 = vmatpush1.bf16.msra.mxu0 %v1033
        %1155 = vmatprep.subr.bf16.mxu0 %v1038
        %1156 = vmatpush1.bf16.msra.mxu0 %v1037
        %1157 = vmatprep.subr.bf16.mxu0 %v1042
        %1158 = vmatpush1.bf16.msra.mxu0 %v1041
        %1159 = vmatprep.subr.bf16.mxu0 %v1046
        %1160 = vmatpush1.bf16.msra.mxu0 %v1045
        %1161 = vmatprep.subr.bf16.mxu0 %v1050
        %1162 = vmatpush1.bf16.msra.mxu0 %v1049
        %1163 = vmatprep.subr.bf16.mxu0 %v1054
        %1164 = vmatpush1.bf16.msra.mxu0 %v1053
        %1165 = vmatprep.subr.bf16.mxu0 %v1058
        %1166 = vmatpush1.bf16.msra.mxu0 %v1057
        %1167 = vmatprep.subr.bf16.mxu0 %v1062
        %1168 = vmatpush1.bf16.msra.mxu0 %v1061
        %1169 = vmatprep.subr.bf16.mxu0 %v1066
        %1170 = vmatpush1.bf16.msra.mxu0 %v1065
        %1171 = vmatprep.subr.bf16.mxu0 %v1070
        %1172 = vmatpush1.bf16.msra.mxu0 %v1069
        %1173 = vmatprep.subr.bf16.mxu0 %v1074
        %1174 = vmatpush1.bf16.msra.mxu0 %v1073
        %1175 = vmatprep.subr.bf16.mxu0 %v1078
        %1176 = vmatpush1.bf16.msra.mxu0 %v1077
        %1177 = vmatprep.mubr.bf16.mxu0 %v754
        %1178 = vmatmul.mubr.bf16.gmra.mrb[0].mxu0 %v753
        %v1179 = vpop.f32.mrb[0].mxu0
        %v1180 = vadd.f32 0.0, %v1179
        %v1181 = vpop.f32.mrb[0].mxu0
        %v1182 = vadd.f32 0.0, %v1181
        %v1183 = vpop.f32.mrb[0].mxu0
        %v1184 = vadd.f32 0.0, %v1183
        %v1185 = vpop.f32.mrb[0].mxu0
        %v1186 = vadd.f32 0.0, %v1185
        %1187 = vmatprep.mubr.bf16.mxu0 %v756
        %1188 = vmatmul.mubr.bf16.gmra.mrb[0].mxu0 %v755
        %v1189 = vpop.f32.mrb[0].mxu0
        %v1190 = vadd.f32 0.0, %v1189
        %v1191 = vpop.f32.mrb[0].mxu0
        %v1192 = vadd.f32 0.0, %v1191
        %v1193 = vpop.f32.mrb[0].mxu0
        %v1194 = vadd.f32 0.0, %v1193
        %v1195 = vpop.f32.mrb[0].mxu0
        %v1196 = vadd.f32 0.0, %v1195
        %1197 = vmatprep.mubr.bf16.mxu0 %v758
        %1198 = vmatmul.mubr.bf16.gmra.mrb[0].mxu0 %v757
        %v1199 = vpop.f32.mrb[0].mxu0
        %v1200 = vadd.f32 0.0, %v1199
        %v1201 = vpop.f32.mrb[0].mxu0
        %v1202 = vadd.f32 0.0, %v1201
        %v1203 = vpop.f32.mrb[0].mxu0
        %v1204 = vadd.f32 0.0, %v1203
        %v1205 = vpop.f32.mrb[0].mxu0
        %v1206 = vadd.f32 0.0, %v1205
        %1207 = vmatprep.mubr.bf16.mxu0 %v760
        %1208 = vmatmul.mubr.bf16.gmra.mrb[0].mxu0 %v759
        %v1209 = vpop.f32.mrb[0].mxu0
        %v1210 = vadd.f32 0.0, %v1209
        %v1211 = vpop.f32.mrb[0].mxu0
        %v1212 = vadd.f32 0.0, %v1211
        %v1213 = vpop.f32.mrb[0].mxu0
        %v1214 = vadd.f32 0.0, %v1213
        %v1215 = vpop.f32.mrb[0].mxu0
        %v1216 = vadd.f32 0.0, %v1215
        %1217 = vdwg.mxu0
        %1218 = vmatprep.subr.bf16.mxu0 %v1020
        %1219 = vmatpush1.bf16.msra.mxu0 %v1019
        %1220 = vmatprep.subr.bf16.mxu0 %v1024
        %1221 = vmatpush1.bf16.msra.mxu0 %v1023
        %1222 = vmatprep.subr.bf16.mxu0 %v1028
        %1223 = vmatpush1.bf16.msra.mxu0 %v1027
        %1224 = vmatprep.subr.bf16.mxu0 %v1032
        %1225 = vmatpush1.bf16.msra.mxu0 %v1031
        %1226 = vmatprep.subr.bf16.mxu0 %v1036
        %1227 = vmatpush1.bf16.msra.mxu0 %v1035
        %1228 = vmatprep.subr.bf16.mxu0 %v1040
        %1229 = vmatpush1.bf16.msra.mxu0 %v1039
        %1230 = vmatprep.subr.bf16.mxu0 %v1044
        %1231 = vmatpush1.bf16.msra.mxu0 %v1043
        %1232 = vmatprep.subr.bf16.mxu0 %v1048
        %1233 = vmatpush1.bf16.msra.mxu0 %v1047
        %1234 = vmatprep.subr.bf16.mxu0 %v1052
        %1235 = vmatpush1.bf16.msra.mxu0 %v1051
        %1236 = vmatprep.subr.bf16.mxu0 %v1056
        %1237 = vmatpush1.bf16.msra.mxu0 %v1055
        %1238 = vmatprep.subr.bf16.mxu0 %v1060
        %1239 = vmatpush1.bf16.msra.mxu0 %v1059
        %1240 = vmatprep.subr.bf16.mxu0 %v1064
        %1241 = vmatpush1.bf16.msra.mxu0 %v1063
        %1242 = vmatprep.subr.bf16.mxu0 %v1068
        %1243 = vmatpush1.bf16.msra.mxu0 %v1067
        %1244 = vmatprep.subr.bf16.mxu0 %v1072
        %1245 = vmatpush1.bf16.msra.mxu0 %v1071
        %1246 = vmatprep.subr.bf16.mxu0 %v1076
        %1247 = vmatpush1.bf16.msra.mxu0 %v1075
        %1248 = vmatprep.subr.bf16.mxu0 %v1080
        %1249 = vmatpush1.bf16.msra.mxu0 %v1079
        %1250 = vmatprep.mubr.bf16.mxu0 %v754
        %1251 = vmatmul.mubr.bf16.gmra.mrb[0].mxu0 %v753
        %v1252 = vpop.f32.mrb[0].mxu0
        %v1253 = vadd.f32 0.0, %v1252
        %v1254 = vpop.f32.mrb[0].mxu0
        %v1255 = vadd.f32 0.0, %v1254
        %v1256 = vpop.f32.mrb[0].mxu0
        %v1257 = vadd.f32 0.0, %v1256
        %v1258 = vpop.f32.mrb[0].mxu0
        %v1259 = vadd.f32 0.0, %v1258
        %1260 = vmatprep.mubr.bf16.mxu0 %v756
        %1261 = vmatmul.mubr.bf16.gmra.mrb[0].mxu0 %v755
        %v1262 = vpop.f32.mrb[0].mxu0
        %v1263 = vadd.f32 0.0, %v1262
        %v1264 = vpop.f32.mrb[0].mxu0
        %v1265 = vadd.f32 0.0, %v1264
        %v1266 = vpop.f32.mrb[0].mxu0
        %v1267 = vadd.f32 0.0, %v1266
        %v1268 = vpop.f32.mrb[0].mxu0
        %v1269 = vadd.f32 0.0, %v1268
        %1270 = vmatprep.mubr.bf16.mxu0 %v758
        %1271 = vmatmul.mubr.bf16.gmra.mrb[0].mxu0 %v757
        %v1272 = vpop.f32.mrb[0].mxu0
        %v1273 = vadd.f32 0.0, %v1272
        %v1274 = vpop.f32.mrb[0].mxu0
        %v1275 = vadd.f32 0.0, %v1274
        %v1276 = vpop.f32.mrb[0].mxu0
        %v1277 = vadd.f32 0.0, %v1276
        %v1278 = vpop.f32.mrb[0].mxu0
        %v1279 = vadd.f32 0.0, %v1278
        %1280 = vmatprep.mubr.bf16.mxu0 %v760
        %1281 = vmatmul.mubr.bf16.gmra.mrb[0].mxu0 %v759
        %v1282 = vpop.f32.mrb[0].mxu0
        %v1283 = vadd.f32 0.0, %v1282
        %v1284 = vpop.f32.mrb[0].mxu0
        %v1285 = vadd.f32 0.0, %v1284
        %v1286 = vpop.f32.mrb[0].mxu0
        %v1287 = vadd.f32 0.0, %v1286
        %v1288 = vpop.f32.mrb[0].mxu0
        %v1289 = vadd.f32 0.0, %v1288
        %1290 = vdwg.mxu0
        %v1291 = vld [vmem:[#allocation7] sm:$0xff]
        %v1292 = vld [vmem:[#allocation7 + $0x8] sm:$0xff]
        %v1293 = vld [vmem:[#allocation7 + $0x10] sm:$0xff]
        %v1294 = vld [vmem:[#allocation7 + $0x18] sm:$0xff]
        %v1295 = vld [vmem:[#allocation7 + $0x20] sm:$0xff]
        %v1296 = vld [vmem:[#allocation7 + $0x28] sm:$0xff]
        %v1297 = vld [vmem:[#allocation7 + $0x30] sm:$0xff]
        %v1298 = vld [vmem:[#allocation7 + $0x38] sm:$0xff]
        %v1299 = vld [vmem:[#allocation7 + $0x40] sm:$0xff]
        %v1300 = vld [vmem:[#allocation7 + $0x48] sm:$0xff]
        %v1301 = vld [vmem:[#allocation7 + $0x50] sm:$0xff]
        %v1302 = vld [vmem:[#allocation7 + $0x58] sm:$0xff]
        %v1303 = vld [vmem:[#allocation7 + $0x60] sm:$0xff]
        %v1304 = vld [vmem:[#allocation7 + $0x68] sm:$0xff]
        %v1305 = vld [vmem:[#allocation7 + $0x70] sm:$0xff]
        %v1306 = vld [vmem:[#allocation7 + $0x78] sm:$0xff]
        %v1307 = vld [vmem:[#allocation7 + $0x80] sm:$0xff]
        %v1308 = vld [vmem:[#allocation7 + $0x88] sm:$0xff]
        %v1309 = vld [vmem:[#allocation7 + $0x90] sm:$0xff]
        %v1310 = vld [vmem:[#allocation7 + $0x98] sm:$0xff]
        %v1311 = vld [vmem:[#allocation7 + $0xa0] sm:$0xff]
        %v1312 = vld [vmem:[#allocation7 + $0xa8] sm:$0xff]
        %v1313 = vld [vmem:[#allocation7 + $0xb0] sm:$0xff]
        %v1314 = vld [vmem:[#allocation7 + $0xb8] sm:$0xff]
        %v1315 = vld [vmem:[#allocation7 + $0xc0] sm:$0xff]
        %v1316 = vld [vmem:[#allocation7 + $0xc8] sm:$0xff]
        %v1317 = vld [vmem:[#allocation7 + $0xd0] sm:$0xff]
        %v1318 = vld [vmem:[#allocation7 + $0xd8] sm:$0xff]
        %v1319 = vld [vmem:[#allocation7 + $0xe0] sm:$0xff]
        %v1320 = vld [vmem:[#allocation7 + $0xe8] sm:$0xff]
        %v1321 = vld [vmem:[#allocation7 + $0xf0] sm:$0xff]
        %v1322 = vld [vmem:[#allocation7 + $0xf8] sm:$0xff]
        %v1355 = vunpack.c.l.b16 %v1291
        %v1356 = vunpack.c.h.b16 %v1291
        %v1357 = vunpack.c.l.b16 %v1292
        %v1358 = vunpack.c.h.b16 %v1292
        %v1359 = vunpack.c.l.b16 %v1293
        %v1360 = vunpack.c.h.b16 %v1293
        %v1361 = vunpack.c.l.b16 %v1294
        %v1362 = vunpack.c.h.b16 %v1294
        %v1363 = vunpack.c.l.b16 %v1295
        %v1364 = vunpack.c.h.b16 %v1295
        %v1365 = vunpack.c.l.b16 %v1296
        %v1366 = vunpack.c.h.b16 %v1296
        %v1367 = vunpack.c.l.b16 %v1297
        %v1368 = vunpack.c.h.b16 %v1297
        %v1369 = vunpack.c.l.b16 %v1298
        %v1370 = vunpack.c.h.b16 %v1298
        %v1371 = vunpack.c.l.b16 %v1299
        %v1372 = vunpack.c.h.b16 %v1299
        %v1373 = vunpack.c.l.b16 %v1300
        %v1374 = vunpack.c.h.b16 %v1300
        %v1375 = vunpack.c.l.b16 %v1301
        %v1376 = vunpack.c.h.b16 %v1301
        %v1377 = vunpack.c.l.b16 %v1302
        %v1378 = vunpack.c.h.b16 %v1302
        %v1379 = vunpack.c.l.b16 %v1303
        %v1380 = vunpack.c.h.b16 %v1303
        %v1381 = vunpack.c.l.b16 %v1304
        %v1382 = vunpack.c.h.b16 %v1304
        %v1383 = vunpack.c.l.b16 %v1305
        %v1384 = vunpack.c.h.b16 %v1305
        %v1385 = vunpack.c.l.b16 %v1306
        %v1386 = vunpack.c.h.b16 %v1306
        %v1387 = vunpack.c.l.b16 %v1307
        %v1388 = vunpack.c.h.b16 %v1307
        %v1389 = vunpack.c.l.b16 %v1308
        %v1390 = vunpack.c.h.b16 %v1308
        %v1391 = vunpack.c.l.b16 %v1309
        %v1392 = vunpack.c.h.b16 %v1309
        %v1393 = vunpack.c.l.b16 %v1310
        %v1394 = vunpack.c.h.b16 %v1310
        %v1395 = vunpack.c.l.b16 %v1311
        %v1396 = vunpack.c.h.b16 %v1311
        %v1397 = vunpack.c.l.b16 %v1312
        %v1398 = vunpack.c.h.b16 %v1312
        %v1399 = vunpack.c.l.b16 %v1313
        %v1400 = vunpack.c.h.b16 %v1313
        %v1401 = vunpack.c.l.b16 %v1314
        %v1402 = vunpack.c.h.b16 %v1314
        %v1403 = vunpack.c.l.b16 %v1315
        %v1404 = vunpack.c.h.b16 %v1315
        %v1405 = vunpack.c.l.b16 %v1316
        %v1406 = vunpack.c.h.b16 %v1316
        %v1407 = vunpack.c.l.b16 %v1317
        %v1408 = vunpack.c.h.b16 %v1317
        %v1409 = vunpack.c.l.b16 %v1318
        %v1410 = vunpack.c.h.b16 %v1318
        %v1411 = vunpack.c.l.b16 %v1319
        %v1412 = vunpack.c.h.b16 %v1319
        %v1413 = vunpack.c.l.b16 %v1320
        %v1414 = vunpack.c.h.b16 %v1320
        %v1415 = vunpack.c.l.b16 %v1321
        %v1416 = vunpack.c.h.b16 %v1321
        %v1417 = vunpack.c.l.b16 %v1322
        %v1418 = vunpack.c.h.b16 %v1322
        %v1419 = vpack.c.b16 %v1357, %v1355
        %v1420 = vpack.c.b16 %v1358, %v1356
        %v1421 = vpack.c.b16 %v1361, %v1359
        %v1422 = vpack.c.b16 %v1362, %v1360
        %v1423 = vpack.c.b16 %v1365, %v1363
        %v1424 = vpack.c.b16 %v1366, %v1364
        %v1425 = vpack.c.b16 %v1369, %v1367
        %v1426 = vpack.c.b16 %v1370, %v1368
        %v1427 = vpack.c.b16 %v1373, %v1371
        %v1428 = vpack.c.b16 %v1374, %v1372
        %v1429 = vpack.c.b16 %v1377, %v1375
        %v1430 = vpack.c.b16 %v1378, %v1376
        %v1431 = vpack.c.b16 %v1381, %v1379
        %v1432 = vpack.c.b16 %v1382, %v1380
        %v1433 = vpack.c.b16 %v1385, %v1383
        %v1434 = vpack.c.b16 %v1386, %v1384
        %v1435 = vpack.c.b16 %v1389, %v1387
        %v1436 = vpack.c.b16 %v1390, %v1388
        %v1437 = vpack.c.b16 %v1393, %v1391
        %v1438 = vpack.c.b16 %v1394, %v1392
        %v1439 = vpack.c.b16 %v1397, %v1395
        %v1440 = vpack.c.b16 %v1398, %v1396
        %v1441 = vpack.c.b16 %v1401, %v1399
        %v1442 = vpack.c.b16 %v1402, %v1400
        %v1443 = vpack.c.b16 %v1405, %v1403
        %v1444 = vpack.c.b16 %v1406, %v1404
        %v1445 = vpack.c.b16 %v1409, %v1407
        %v1446 = vpack.c.b16 %v1410, %v1408
        %v1447 = vpack.c.b16 %v1413, %v1411
        %v1448 = vpack.c.b16 %v1414, %v1412
        %v1449 = vpack.c.b16 %v1417, %v1415
        %v1450 = vpack.c.b16 %v1418, %v1416
        %1483 = vmatprep.subr.bf16.mxu0 %v1420
        %1484 = vmatpush1.bf16.msra.mxu0 %v1419
        %1485 = vmatprep.subr.bf16.mxu0 %v1422
        %1486 = vmatpush1.bf16.msra.mxu0 %v1421
        %1487 = vmatprep.subr.bf16.mxu0 %v1424
        %1488 = vmatpush1.bf16.msra.mxu0 %v1423
        %1489 = vmatprep.subr.bf16.mxu0 %v1426
        %1490 = vmatpush1.bf16.msra.mxu0 %v1425
        %1491 = vmatprep.subr.bf16.mxu0 %v1428
        %1492 = vmatpush1.bf16.msra.mxu0 %v1427
        %1493 = vmatprep.subr.bf16.mxu0 %v1430
        %1494 = vmatpush1.bf16.msra.mxu0 %v1429
        %1495 = vmatprep.subr.bf16.mxu0 %v1432
        %1496 = vmatpush1.bf16.msra.mxu0 %v1431
        %1497 = vmatprep.subr.bf16.mxu0 %v1434
        %1498 = vmatpush1.bf16.msra.mxu0 %v1433
        %1499 = vmatprep.subr.bf16.mxu0 %v1436
        %1500 = vmatpush1.bf16.msra.mxu0 %v1435
        %1501 = vmatprep.subr.bf16.mxu0 %v1438
        %1502 = vmatpush1.bf16.msra.mxu0 %v1437
        %1503 = vmatprep.subr.bf16.mxu0 %v1440
        %1504 = vmatpush1.bf16.msra.mxu0 %v1439
        %1505 = vmatprep.subr.bf16.mxu0 %v1442
        %1506 = vmatpush1.bf16.msra.mxu0 %v1441
        %1507 = vmatprep.subr.bf16.mxu0 %v1444
        %1508 = vmatpush1.bf16.msra.mxu0 %v1443
        %1509 = vmatprep.subr.bf16.mxu0 %v1446
        %1510 = vmatpush1.bf16.msra.mxu0 %v1445
        %1511 = vmatprep.subr.bf16.mxu0 %v1448
        %1512 = vmatpush1.bf16.msra.mxu0 %v1447
        %1513 = vmatprep.subr.bf16.mxu0 %v1450
        %1514 = vmatpush1.bf16.msra.mxu0 %v1449
        %1515 = vmatprep.mubr.bf16.mxu0 %v754
        %1516 = vmatmul.mubr.bf16.gmra.mrb[0].mxu0 %v753
        %v1517 = vpop.f32.mrb[0].mxu0
        %v1518 = vadd.f32 0.0, %v1517
        %v1519 = vpop.f32.mrb[0].mxu0
        %v1520 = vadd.f32 0.0, %v1519
        %v1521 = vpop.f32.mrb[0].mxu0
        %v1522 = vadd.f32 0.0, %v1521
        %v1523 = vpop.f32.mrb[0].mxu0
        %v1524 = vadd.f32 0.0, %v1523
        %1525 = vmatprep.mubr.bf16.mxu0 %v756
        %1526 = vmatmul.mubr.bf16.gmra.mrb[0].mxu0 %v755
        %v1527 = vpop.f32.mrb[0].mxu0
        %v1528 = vadd.f32 0.0, %v1527
        %v1529 = vpop.f32.mrb[0].mxu0
        %v1530 = vadd.f32 0.0, %v1529
        %v1531 = vpop.f32.mrb[0].mxu0
        %v1532 = vadd.f32 0.0, %v1531
        %v1533 = vpop.f32.mrb[0].mxu0
        %v1534 = vadd.f32 0.0, %v1533
        %1535 = vmatprep.mubr.bf16.mxu0 %v758
        %1536 = vmatmul.mubr.bf16.gmra.mrb[0].mxu0 %v757
        %v1537 = vpop.f32.mrb[0].mxu0
        %v1538 = vadd.f32 0.0, %v1537
        %v1539 = vpop.f32.mrb[0].mxu0
        %v1540 = vadd.f32 0.0, %v1539
        %v1541 = vpop.f32.mrb[0].mxu0
        %v1542 = vadd.f32 0.0, %v1541
        %v1543 = vpop.f32.mrb[0].mxu0
        %v1544 = vadd.f32 0.0, %v1543
        %1545 = vmatprep.mubr.bf16.mxu0 %v760
        %1546 = vmatmul.mubr.bf16.gmra.mrb[0].mxu0 %v759
        %v1547 = vpop.f32.mrb[0].mxu0
        %v1548 = vadd.f32 0.0, %v1547
        %v1549 = vpop.f32.mrb[0].mxu0
        %v1550 = vadd.f32 0.0, %v1549
        %v1551 = vpop.f32.mrb[0].mxu0
        %v1552 = vadd.f32 0.0, %v1551
        %v1553 = vpop.f32.mrb[0].mxu0
        %v1554 = vadd.f32 0.0, %v1553
        %1555 = vdwg.mxu0
        %v1556 = vld [vmem:[#allocation8] sm:$0xff]
        %v1557 = vld [vmem:[#allocation8 + $0x8] sm:$0xff]
        %v1558 = vld [vmem:[#allocation8 + $0x10] sm:$0xff]
        %v1559 = vld [vmem:[#allocation8 + $0x18] sm:$0xff]
        %v1560 = vld [vmem:[#allocation8 + $0x20] sm:$0xff]
        %v1561 = vld [vmem:[#allocation8 + $0x28] sm:$0xff]
        %v1562 = vld [vmem:[#allocation8 + $0x30] sm:$0xff]
        %v1563 = vld [vmem:[#allocation8 + $0x38] sm:$0xff]
        %v1564 = vld [vmem:[#allocation8 + $0x40] sm:$0xff]
        %v1565 = vld [vmem:[#allocation8 + $0x48] sm:$0xff]
        %v1566 = vld [vmem:[#allocation8 + $0x50] sm:$0xff]
        %v1567 = vld [vmem:[#allocation8 + $0x58] sm:$0xff]
        %v1568 = vld [vmem:[#allocation8 + $0x60] sm:$0xff]
        %v1569 = vld [vmem:[#allocation8 + $0x68] sm:$0xff]
        %v1570 = vld [vmem:[#allocation8 + $0x70] sm:$0xff]
        %v1571 = vld [vmem:[#allocation8 + $0x78] sm:$0xff]
        %v1572 = vld [vmem:[#allocation8 + $0x80] sm:$0xff]
        %v1573 = vld [vmem:[#allocation8 + $0x88] sm:$0xff]
        %v1574 = vld [vmem:[#allocation8 + $0x90] sm:$0xff]
        %v1575 = vld [vmem:[#allocation8 + $0x98] sm:$0xff]
        %v1576 = vld [vmem:[#allocation8 + $0xa0] sm:$0xff]
        %v1577 = vld [vmem:[#allocation8 + $0xa8] sm:$0xff]
        %v1578 = vld [vmem:[#allocation8 + $0xb0] sm:$0xff]
        %v1579 = vld [vmem:[#allocation8 + $0xb8] sm:$0xff]
        %v1580 = vld [vmem:[#allocation8 + $0xc0] sm:$0xff]
        %v1581 = vld [vmem:[#allocation8 + $0xc8] sm:$0xff]
        %v1582 = vld [vmem:[#allocation8 + $0xd0] sm:$0xff]
        %v1583 = vld [vmem:[#allocation8 + $0xd8] sm:$0xff]
        %v1584 = vld [vmem:[#allocation8 + $0xe0] sm:$0xff]
        %v1585 = vld [vmem:[#allocation8 + $0xe8] sm:$0xff]
        %v1586 = vld [vmem:[#allocation8 + $0xf0] sm:$0xff]
        %v1587 = vld [vmem:[#allocation8 + $0xf8] sm:$0xff]
        %v1620 = vunpack.c.l.b16 %v1556
        %v1621 = vunpack.c.h.b16 %v1556
        %v1622 = vunpack.c.l.b16 %v1557
        %v1623 = vunpack.c.h.b16 %v1557
        %v1624 = vunpack.c.l.b16 %v1558
        %v1625 = vunpack.c.h.b16 %v1558
        %v1626 = vunpack.c.l.b16 %v1559
        %v1627 = vunpack.c.h.b16 %v1559
        %v1628 = vunpack.c.l.b16 %v1560
        %v1629 = vunpack.c.h.b16 %v1560
        %v1630 = vunpack.c.l.b16 %v1561
        %v1631 = vunpack.c.h.b16 %v1561
        %v1632 = vunpack.c.l.b16 %v1562
        %v1633 = vunpack.c.h.b16 %v1562
        %v1634 = vunpack.c.l.b16 %v1563
        %v1635 = vunpack.c.h.b16 %v1563
        %v1636 = vunpack.c.l.b16 %v1564
        %v1637 = vunpack.c.h.b16 %v1564
        %v1638 = vunpack.c.l.b16 %v1565
        %v1639 = vunpack.c.h.b16 %v1565
        %v1640 = vunpack.c.l.b16 %v1566
        %v1641 = vunpack.c.h.b16 %v1566
        %v1642 = vunpack.c.l.b16 %v1567
        %v1643 = vunpack.c.h.b16 %v1567
        %v1644 = vunpack.c.l.b16 %v1568
        %v1645 = vunpack.c.h.b16 %v1568
        %v1646 = vunpack.c.l.b16 %v1569
        %v1647 = vunpack.c.h.b16 %v1569
        %v1648 = vunpack.c.l.b16 %v1570
        %v1649 = vunpack.c.h.b16 %v1570
        %v1650 = vunpack.c.l.b16 %v1571
        %v1651 = vunpack.c.h.b16 %v1571
        %v1652 = vunpack.c.l.b16 %v1572
        %v1653 = vunpack.c.h.b16 %v1572
        %v1654 = vunpack.c.l.b16 %v1573
        %v1655 = vunpack.c.h.b16 %v1573
        %v1656 = vunpack.c.l.b16 %v1574
        %v1657 = vunpack.c.h.b16 %v1574
        %v1658 = vunpack.c.l.b16 %v1575
        %v1659 = vunpack.c.h.b16 %v1575
        %v1660 = vunpack.c.l.b16 %v1576
        %v1661 = vunpack.c.h.b16 %v1576
        %v1662 = vunpack.c.l.b16 %v1577
        %v1663 = vunpack.c.h.b16 %v1577
        %v1664 = vunpack.c.l.b16 %v1578
        %v1665 = vunpack.c.h.b16 %v1578
        %v1666 = vunpack.c.l.b16 %v1579
        %v1667 = vunpack.c.h.b16 %v1579
        %v1668 = vunpack.c.l.b16 %v1580
        %v1669 = vunpack.c.h.b16 %v1580
        %v1670 = vunpack.c.l.b16 %v1581
        %v1671 = vunpack.c.h.b16 %v1581
        %v1672 = vunpack.c.l.b16 %v1582
        %v1673 = vunpack.c.h.b16 %v1582
        %v1674 = vunpack.c.l.b16 %v1583
        %v1675 = vunpack.c.h.b16 %v1583
        %v1676 = vunpack.c.l.b16 %v1584
        %v1677 = vunpack.c.h.b16 %v1584
        %v1678 = vunpack.c.l.b16 %v1585
        %v1679 = vunpack.c.h.b16 %v1585
        %v1680 = vunpack.c.l.b16 %v1586
        %v1681 = vunpack.c.h.b16 %v1586
        %v1682 = vunpack.c.l.b16 %v1587
        %v1683 = vunpack.c.h.b16 %v1587
        %v1684 = vpack.c.b16 %v1622, %v1620
        %v1685 = vpack.c.b16 %v1623, %v1621
        %v1686 = vpack.c.b16 %v1626, %v1624
        %v1687 = vpack.c.b16 %v1627, %v1625
        %v1688 = vpack.c.b16 %v1630, %v1628
        %v1689 = vpack.c.b16 %v1631, %v1629
        %v1690 = vpack.c.b16 %v1634, %v1632
        %v1691 = vpack.c.b16 %v1635, %v1633
        %v1692 = vpack.c.b16 %v1638, %v1636
        %v1693 = vpack.c.b16 %v1639, %v1637
        %v1694 = vpack.c.b16 %v1642, %v1640
        %v1695 = vpack.c.b16 %v1643, %v1641
        %v1696 = vpack.c.b16 %v1646, %v1644
        %v1697 = vpack.c.b16 %v1647, %v1645
        %v1698 = vpack.c.b16 %v1650, %v1648
        %v1699 = vpack.c.b16 %v1651, %v1649
        %v1700 = vpack.c.b16 %v1654, %v1652
        %v1701 = vpack.c.b16 %v1655, %v1653
        %v1702 = vpack.c.b16 %v1658, %v1656
        %v1703 = vpack.c.b16 %v1659, %v1657
        %v1704 = vpack.c.b16 %v1662, %v1660
        %v1705 = vpack.c.b16 %v1663, %v1661
        %v1706 = vpack.c.b16 %v1666, %v1664
        %v1707 = vpack.c.b16 %v1667, %v1665
        %v1708 = vpack.c.b16 %v1670, %v1668
        %v1709 = vpack.c.b16 %v1671, %v1669
        %v1710 = vpack.c.b16 %v1674, %v1672
        %v1711 = vpack.c.b16 %v1675, %v1673
        %v1712 = vpack.c.b16 %v1678, %v1676
        %v1713 = vpack.c.b16 %v1679, %v1677
        %v1714 = vpack.c.b16 %v1682, %v1680
        %v1715 = vpack.c.b16 %v1683, %v1681
        %1748 = vmatprep.subr.bf16.mxu0 %v1685
        %1749 = vmatpush1.bf16.msra.mxu0 %v1684
        %1750 = vmatprep.subr.bf16.mxu0 %v1687
        %1751 = vmatpush1.bf16.msra.mxu0 %v1686
        %1752 = vmatprep.subr.bf16.mxu0 %v1689
        %1753 = vmatpush1.bf16.msra.mxu0 %v1688
        %1754 = vmatprep.subr.bf16.mxu0 %v1691
        %1755 = vmatpush1.bf16.msra.mxu0 %v1690
        %1756 = vmatprep.subr.bf16.mxu0 %v1693
        %1757 = vmatpush1.bf16.msra.mxu0 %v1692
        %1758 = vmatprep.subr.bf16.mxu0 %v1695
        %1759 = vmatpush1.bf16.msra.mxu0 %v1694
        %1760 = vmatprep.subr.bf16.mxu0 %v1697
        %1761 = vmatpush1.bf16.msra.mxu0 %v1696
        %1762 = vmatprep.subr.bf16.mxu0 %v1699
        %1763 = vmatpush1.bf16.msra.mxu0 %v1698
        %1764 = vmatprep.subr.bf16.mxu0 %v1701
        %1765 = vmatpush1.bf16.msra.mxu0 %v1700
        %1766 = vmatprep.subr.bf16.mxu0 %v1703
        %1767 = vmatpush1.bf16.msra.mxu0 %v1702
        %1768 = vmatprep.subr.bf16.mxu0 %v1705
        %1769 = vmatpush1.bf16.msra.mxu0 %v1704
        %1770 = vmatprep.subr.bf16.mxu0 %v1707
        %1771 = vmatpush1.bf16.msra.mxu0 %v1706
        %1772 = vmatprep.subr.bf16.mxu0 %v1709
        %1773 = vmatpush1.bf16.msra.mxu0 %v1708
        %1774 = vmatprep.subr.bf16.mxu0 %v1711
        %1775 = vmatpush1.bf16.msra.mxu0 %v1710
        %1776 = vmatprep.subr.bf16.mxu0 %v1713
        %1777 = vmatpush1.bf16.msra.mxu0 %v1712
        %1778 = vmatprep.subr.bf16.mxu0 %v1715
        %1779 = vmatpush1.bf16.msra.mxu0 %v1714
        %1780 = vmatprep.mubr.bf16.mxu0 %v754
        %1781 = vmatmul.mubr.bf16.gmra.mrb[0].mxu0 %v753
        %v1782 = vpop.f32.mrb[0].mxu0
        %v1783 = vadd.f32 0.0, %v1782
        %v1784 = vpop.f32.mrb[0].mxu0
        %v1785 = vadd.f32 0.0, %v1784
        %v1786 = vpop.f32.mrb[0].mxu0
        %v1787 = vadd.f32 0.0, %v1786
        %v1788 = vpop.f32.mrb[0].mxu0
        %v1789 = vadd.f32 0.0, %v1788
        %1790 = vmatprep.mubr.bf16.mxu0 %v756
        %1791 = vmatmul.mubr.bf16.gmra.mrb[0].mxu0 %v755
        %v1792 = vpop.f32.mrb[0].mxu0
        %v1793 = vadd.f32 0.0, %v1792
        %v1794 = vpop.f32.mrb[0].mxu0
        %v1795 = vadd.f32 0.0, %v1794
        %v1796 = vpop.f32.mrb[0].mxu0
        %v1797 = vadd.f32 0.0, %v1796
        %v1798 = vpop.f32.mrb[0].mxu0
        %v1799 = vadd.f32 0.0, %v1798
        %1800 = vmatprep.mubr.bf16.mxu0 %v758
        %1801 = vmatmul.mubr.bf16.gmra.mrb[0].mxu0 %v757
        %v1802 = vpop.f32.mrb[0].mxu0
        %v1803 = vadd.f32 0.0, %v1802
        %v1804 = vpop.f32.mrb[0].mxu0
        %v1805 = vadd.f32 0.0, %v1804
        %v1806 = vpop.f32.mrb[0].mxu0
        %v1807 = vadd.f32 0.0, %v1806
        %v1808 = vpop.f32.mrb[0].mxu0
        %v1809 = vadd.f32 0.0, %v1808
        %1810 = vmatprep.mubr.bf16.mxu0 %v760
        %1811 = vmatmul.mubr.bf16.gmra.mrb[0].mxu0 %v759
        %v1812 = vpop.f32.mrb[0].mxu0
        %v1813 = vadd.f32 0.0, %v1812
        %v1814 = vpop.f32.mrb[0].mxu0
        %v1815 = vadd.f32 0.0, %v1814
        %v1816 = vpop.f32.mrb[0].mxu0
        %v1817 = vadd.f32 0.0, %v1816
        %v1818 = vpop.f32.mrb[0].mxu0
        %v1819 = vadd.f32 0.0, %v1818
        %1820 = vdwg.mxu0
        %v1821 = vld [vmem:[%s524] sm:$0xff]
        %v1822 = vld [vmem:[%s524 + $0x8] sm:$0xff]
        %v1823 = vld [vmem:[%s524 + $0x10] sm:$0xff]
        %v1824 = vld [vmem:[%s524 + $0x18] sm:$0xff]
        %v1825 = vld [vmem:[%s524 + $0x20] sm:$0xff]
        %v1826 = vld [vmem:[%s524 + $0x28] sm:$0xff]
        %v1827 = vld [vmem:[%s524 + $0x30] sm:$0xff]
        %v1828 = vld [vmem:[%s524 + $0x38] sm:$0xff]
        %v1829 = vld [vmem:[%s524 + $0x40] sm:$0xff]
        %v1830 = vld [vmem:[%s524 + $0x48] sm:$0xff]
        %v1831 = vld [vmem:[%s524 + $0x50] sm:$0xff]
        %v1832 = vld [vmem:[%s524 + $0x58] sm:$0xff]
        %v1833 = vld [vmem:[%s524 + $0x60] sm:$0xff]
        %v1834 = vld [vmem:[%s524 + $0x68] sm:$0xff]
        %v1835 = vld [vmem:[%s524 + $0x70] sm:$0xff]
        %v1836 = vld [vmem:[%s524 + $0x78] sm:$0xff]
        %v1837 = vld [vmem:[%s524 + $0x80] sm:$0xff]
        %v1838 = vld [vmem:[%s524 + $0x88] sm:$0xff]
        %v1839 = vld [vmem:[%s524 + $0x90] sm:$0xff]
        %v1840 = vld [vmem:[%s524 + $0x98] sm:$0xff]
        %v1841 = vld [vmem:[%s524 + $0xa0] sm:$0xff]
        %v1842 = vld [vmem:[%s524 + $0xa8] sm:$0xff]
        %v1843 = vld [vmem:[%s524 + $0xb0] sm:$0xff]
        %v1844 = vld [vmem:[%s524 + $0xb8] sm:$0xff]
        %v1845 = vld [vmem:[%s524 + $0xc0] sm:$0xff]
        %v1846 = vld [vmem:[%s524 + $0xc8] sm:$0xff]
        %v1847 = vld [vmem:[%s524 + $0xd0] sm:$0xff]
        %v1848 = vld [vmem:[%s524 + $0xd8] sm:$0xff]
        %v1849 = vld [vmem:[%s524 + $0xe0] sm:$0xff]
        %v1850 = vld [vmem:[%s524 + $0xe8] sm:$0xff]
        %v1851 = vld [vmem:[%s524 + $0xf0] sm:$0xff]
        %v1852 = vld [vmem:[%s524 + $0xf8] sm:$0xff]
        %v1853 = vld [vmem:[%s533] sm:$0xff]
        %v1854 = vld [vmem:[%s533 + $0x8] sm:$0xff]
        %v1855 = vld [vmem:[%s533 + $0x10] sm:$0xff]
        %v1856 = vld [vmem:[%s533 + $0x18] sm:$0xff]
        %v1857 = vld [vmem:[%s533 + $0x20] sm:$0xff]
        %v1858 = vld [vmem:[%s533 + $0x28] sm:$0xff]
        %v1859 = vld [vmem:[%s533 + $0x30] sm:$0xff]
        %v1860 = vld [vmem:[%s533 + $0x38] sm:$0xff]
        %v1861 = vld [vmem:[%s533 + $0x40] sm:$0xff]
        %v1862 = vld [vmem:[%s533 + $0x48] sm:$0xff]
        %v1863 = vld [vmem:[%s533 + $0x50] sm:$0xff]
        %v1864 = vld [vmem:[%s533 + $0x58] sm:$0xff]
        %v1865 = vld [vmem:[%s533 + $0x60] sm:$0xff]
        %v1866 = vld [vmem:[%s533 + $0x68] sm:$0xff]
        %v1867 = vld [vmem:[%s533 + $0x70] sm:$0xff]
        %v1868 = vld [vmem:[%s533 + $0x78] sm:$0xff]
        %v1869 = vld [vmem:[%s533 + $0x80] sm:$0xff]
        %v1870 = vld [vmem:[%s533 + $0x88] sm:$0xff]
        %v1871 = vld [vmem:[%s533 + $0x90] sm:$0xff]
        %v1872 = vld [vmem:[%s533 + $0x98] sm:$0xff]
        %v1873 = vld [vmem:[%s533 + $0xa0] sm:$0xff]
        %v1874 = vld [vmem:[%s533 + $0xa8] sm:$0xff]
        %v1875 = vld [vmem:[%s533 + $0xb0] sm:$0xff]
        %v1876 = vld [vmem:[%s533 + $0xb8] sm:$0xff]
        %v1877 = vld [vmem:[%s533 + $0xc0] sm:$0xff]
        %v1878 = vld [vmem:[%s533 + $0xc8] sm:$0xff]
        %v1879 = vld [vmem:[%s533 + $0xd0] sm:$0xff]
        %v1880 = vld [vmem:[%s533 + $0xd8] sm:$0xff]
        %v1881 = vld [vmem:[%s533 + $0xe0] sm:$0xff]
        %v1882 = vld [vmem:[%s533 + $0xe8] sm:$0xff]
        %v1883 = vld [vmem:[%s533 + $0xf0] sm:$0xff]
        %v1884 = vld [vmem:[%s533 + $0xf8] sm:$0xff]
        %v1885 = vlaneseq
        %v1886 = vand.u32 %v1885, 127
        %v1887 = vadd.s32 %v1886, 128
        %v1888 = vadd.s32 %v1886, 256
        %v1889 = vadd.s32 %v1886, 384
        %vm1890 = vcmp.lt.s32.totalorder %v1886, 0
        %v1891 = vsub.s32 0, %v1886
        %v1892 = vsel %vm1890, %v1891, %v1886
        %v1893 = vshrl.u32 %v1892, 1
        %v1894 = vand.u32 %v1892, 1
        %v1895 = vsub.s32 0, %v1894
        %v1896 = vsel %vm1890, %v1895, %v1894
        %vm1897 = vcmp.lt.s32.totalorder %v1887, 0
        %v1898 = vsub.s32 0, %v1887
        %v1899 = vsel %vm1897, %v1898, %v1887
        %v1900 = vshrl.u32 %v1899, 1
        %v1901 = vand.u32 %v1899, 1
        %v1902 = vsub.s32 0, %v1901
        %v1903 = vsel %vm1897, %v1902, %v1901
        %vm1904 = vcmp.lt.s32.totalorder %v1888, 0
        %v1905 = vsub.s32 0, %v1888
        %v1906 = vsel %vm1904, %v1905, %v1888
        %v1907 = vshrl.u32 %v1906, 1
        %v1908 = vand.u32 %v1906, 1
        %v1909 = vsub.s32 0, %v1908
        %v1910 = vsel %vm1904, %v1909, %v1908
        %vm1911 = vcmp.lt.s32.totalorder %v1889, 0
        %v1912 = vsub.s32 0, %v1889
        %v1913 = vsel %vm1911, %v1912, %v1889
        %v1914 = vshrl.u32 %v1913, 1
        %v1915 = vand.u32 %v1913, 1
        %v1916 = vsub.s32 0, %v1915
        %v1917 = vsel %vm1911, %v1916, %v1915
        %vm1918 = vcmp.ne.s32.totalorder %v1896, 0
        %vm1919 = vcmp.ne.s32.totalorder %v1903, 0
        %vm1920 = vcmp.ne.s32.totalorder %v1910, 0
        %vm1921 = vcmp.ne.s32.totalorder %v1917, 0
        %vm1922 = vcmp.lt.s32.totalorder %v1896, 0
        %vm1923 = vcmp.lt.s32.totalorder %v1903, 0
        %vm1924 = vcmp.lt.s32.totalorder %v1910, 0
        %vm1925 = vcmp.lt.s32.totalorder %v1917, 0
        %vm1926 = vmand %vm1922, %vm1918
        %vm1927 = vmand %vm1923, %vm1919
        %vm1928 = vmand %vm1924, %vm1920
        %vm1929 = vmand %vm1925, %vm1921
        %v1930 = vadd.s32 %v1896, 2
        %v1931 = vadd.s32 %v1903, 2
        %v1932 = vadd.s32 %v1910, 2
        %v1933 = vadd.s32 %v1917, 2
        %v1934 = vsel %vm1926, %v1930, %v1896
        %v1935 = vsel %vm1927, %v1931, %v1903
        %v1936 = vsel %vm1928, %v1932, %v1910
        %v1937 = vsel %vm1929, %v1933, %v1917
        %vm1938 = vcmp.eq.s32.totalorder %v1934, 0
        %vm1939 = vcmp.eq.s32.totalorder %v1935, 0
        %vm1940 = vcmp.eq.s32.totalorder %v1936, 0
        %vm1941 = vcmp.eq.s32.totalorder %v1937, 0
        %1942 = vrot.lane.b32.xlu0 %v1180, 127
        %v1943 = vpop.permute.xlu0 %1942
        %1944 = vrot.lane.b32.xlu0 %v1184, 127
        %v1945 = vpop.permute.xlu0 %1944
        %1946 = vrot.lane.b32.xlu0 %v1190, 127
        %v1947 = vpop.permute.xlu0 %1946
        %1948 = vrot.lane.b32.xlu0 %v1194, 127
        %v1949 = vpop.permute.xlu0 %1948
        %1950 = vrot.lane.b32.xlu0 %v1200, 127
        %v1951 = vpop.permute.xlu0 %1950
        %1952 = vrot.lane.b32.xlu0 %v1204, 127
        %v1953 = vpop.permute.xlu0 %1952
        %1954 = vrot.lane.b32.xlu0 %v1210, 127
        %v1955 = vpop.permute.xlu0 %1954
        %1956 = vrot.lane.b32.xlu0 %v1214, 127
        %v1957 = vpop.permute.xlu0 %1956
        %1958 = vrot.lane.b32.xlu0 %v1182, 127
        %v1959 = vpop.permute.xlu0 %1958
        %1960 = vrot.lane.b32.xlu0 %v1186, 127
        %v1961 = vpop.permute.xlu0 %1960
        %1962 = vrot.lane.b32.xlu0 %v1192, 127
        %v1963 = vpop.permute.xlu0 %1962
        %1964 = vrot.lane.b32.xlu0 %v1196, 127
        %v1965 = vpop.permute.xlu0 %1964
        %1966 = vrot.lane.b32.xlu0 %v1202, 127
        %v1967 = vpop.permute.xlu0 %1966
        %1968 = vrot.lane.b32.xlu0 %v1206, 127
        %v1969 = vpop.permute.xlu0 %1968
        %1970 = vrot.lane.b32.xlu0 %v1212, 127
        %v1971 = vpop.permute.xlu0 %1970
        %1972 = vrot.lane.b32.xlu0 %v1216, 127
        %v1973 = vpop.permute.xlu0 %1972
        %1974 = vrot.lane.b32.xlu0 %v1253, 127
        %v1975 = vpop.permute.xlu0 %1974
        %1976 = vrot.lane.b32.xlu0 %v1257, 127
        %v1977 = vpop.permute.xlu0 %1976
        %1978 = vrot.lane.b32.xlu0 %v1263, 127
        %v1979 = vpop.permute.xlu0 %1978
        %1980 = vrot.lane.b32.xlu0 %v1267, 127
        %v1981 = vpop.permute.xlu0 %1980
        %1982 = vrot.lane.b32.xlu0 %v1273, 127
        %v1983 = vpop.permute.xlu0 %1982
        %1984 = vrot.lane.b32.xlu0 %v1277, 127
        %v1985 = vpop.permute.xlu0 %1984
        %1986 = vrot.lane.b32.xlu0 %v1283, 127
        %v1987 = vpop.permute.xlu0 %1986
        %1988 = vrot.lane.b32.xlu0 %v1287, 127
        %v1989 = vpop.permute.xlu0 %1988
        %1990 = vrot.lane.b32.xlu0 %v1255, 127
        %v1991 = vpop.permute.xlu0 %1990
        %1992 = vrot.lane.b32.xlu0 %v1259, 127
        %v1993 = vpop.permute.xlu0 %1992
        %1994 = vrot.lane.b32.xlu0 %v1265, 127
        %v1995 = vpop.permute.xlu0 %1994
        %1996 = vrot.lane.b32.xlu0 %v1269, 127
        %v1997 = vpop.permute.xlu0 %1996
        %1998 = vrot.lane.b32.xlu0 %v1275, 127
        %v1999 = vpop.permute.xlu0 %1998
        %2000 = vrot.lane.b32.xlu0 %v1279, 127
        %v2001 = vpop.permute.xlu0 %2000
        %2002 = vrot.lane.b32.xlu0 %v1285, 127
        %v2003 = vpop.permute.xlu0 %2002
        %2004 = vrot.lane.b32.xlu0 %v1289, 127
        %v2005 = vpop.permute.xlu0 %2004
        %vm2006 = vcmp.lt.s32.totalorder %v1886, 127
        %v2007 = vsel %vm2006, %v1975, %v1991
        %v2008 = vsel %vm2006, %v1977, %v1993
        %v2009 = vsel %vm2006, %v1979, %v1995
        %v2010 = vsel %vm2006, %v1981, %v1997
        %v2011 = vsel %vm2006, %v1983, %v1999
        %v2012 = vsel %vm2006, %v1985, %v2001
        %v2013 = vsel %vm2006, %v1987, %v2003
        %v2014 = vsel %vm2006, %v1989, %v2005
        %v2015 = vsel %vm2006, %v1959, %v1975
        %v2016 = vsel %vm2006, %v1961, %v1977
        %v2017 = vsel %vm2006, %v1963, %v1979
        %v2018 = vsel %vm2006, %v1965, %v1981
        %v2019 = vsel %vm2006, %v1967, %v1983
        %v2020 = vsel %vm2006, %v1969, %v1985
        %v2021 = vsel %vm2006, %v1971, %v1987
        %v2022 = vsel %vm2006, %v1973, %v1989
        %v2023 = vsel %vm2006, %v1943, %v1959
        %v2024 = vsel %vm2006, %v1945, %v1961
        %v2025 = vsel %vm2006, %v1947, %v1963
        %v2026 = vsel %vm2006, %v1949, %v1965
        %v2027 = vsel %vm2006, %v1951, %v1967
        %v2028 = vsel %vm2006, %v1953, %v1969
        %v2029 = vsel %vm2006, %v1955, %v1971
        %v2030 = vsel %vm2006, %v1957, %v1973
        %v2031 = vsel %vm2006, %v1991, %v1943
        %v2032 = vsel %vm2006, %v1993, %v1945
        %v2033 = vsel %vm2006, %v1995, %v1947
        %v2034 = vsel %vm2006, %v1997, %v1949
        %v2035 = vsel %vm2006, %v1999, %v1951
        %v2036 = vsel %vm2006, %v2001, %v1953
        %v2037 = vsel %vm2006, %v2003, %v1955
        %v2038 = vsel %vm2006, %v2005, %v1957
        %2039 = vrot.lane.b32.xlu0 %v1180, 1
        %v2040 = vpop.permute.xlu0 %2039
        %2041 = vrot.lane.b32.xlu0 %v1184, 1
        %v2042 = vpop.permute.xlu0 %2041
        %2043 = vrot.lane.b32.xlu0 %v1190, 1
        %v2044 = vpop.permute.xlu0 %2043
        %2045 = vrot.lane.b32.xlu0 %v1194, 1
        %v2046 = vpop.permute.xlu0 %2045
        %2047 = vrot.lane.b32.xlu0 %v1200, 1
        %v2048 = vpop.permute.xlu0 %2047
        %2049 = vrot.lane.b32.xlu0 %v1204, 1
        %v2050 = vpop.permute.xlu0 %2049
        %2051 = vrot.lane.b32.xlu0 %v1210, 1
        %v2052 = vpop.permute.xlu0 %2051
        %2053 = vrot.lane.b32.xlu0 %v1214, 1
        %v2054 = vpop.permute.xlu0 %2053
        %2055 = vrot.lane.b32.xlu0 %v1182, 1
        %v2056 = vpop.permute.xlu0 %2055
        %2057 = vrot.lane.b32.xlu0 %v1186, 1
        %v2058 = vpop.permute.xlu0 %2057
        %2059 = vrot.lane.b32.xlu0 %v1192, 1
        %v2060 = vpop.permute.xlu0 %2059
        %2061 = vrot.lane.b32.xlu0 %v1196, 1
        %v2062 = vpop.permute.xlu0 %2061
        %2063 = vrot.lane.b32.xlu0 %v1202, 1
        %v2064 = vpop.permute.xlu0 %2063
        %2065 = vrot.lane.b32.xlu0 %v1206, 1
        %v2066 = vpop.permute.xlu0 %2065
        %2067 = vrot.lane.b32.xlu0 %v1212, 1
        %v2068 = vpop.permute.xlu0 %2067
        %2069 = vrot.lane.b32.xlu0 %v1216, 1
        %v2070 = vpop.permute.xlu0 %2069
        %2071 = vrot.lane.b32.xlu0 %v1253, 1
        %v2072 = vpop.permute.xlu0 %2071
        %2073 = vrot.lane.b32.xlu0 %v1257, 1
        %v2074 = vpop.permute.xlu0 %2073
        %2075 = vrot.lane.b32.xlu0 %v1263, 1
        %v2076 = vpop.permute.xlu0 %2075
        %2077 = vrot.lane.b32.xlu0 %v1267, 1
        %v2078 = vpop.permute.xlu0 %2077
        %2079 = vrot.lane.b32.xlu0 %v1273, 1
        %v2080 = vpop.permute.xlu0 %2079
        %2081 = vrot.lane.b32.xlu0 %v1277, 1
        %v2082 = vpop.permute.xlu0 %2081
        %2083 = vrot.lane.b32.xlu0 %v1283, 1
        %v2084 = vpop.permute.xlu0 %2083
        %2085 = vrot.lane.b32.xlu0 %v1287, 1
        %v2086 = vpop.permute.xlu0 %2085
        %2087 = vrot.lane.b32.xlu0 %v1255, 1
        %v2088 = vpop.permute.xlu0 %2087
        %2089 = vrot.lane.b32.xlu0 %v1259, 1
        %v2090 = vpop.permute.xlu0 %2089
        %2091 = vrot.lane.b32.xlu0 %v1265, 1
        %v2092 = vpop.permute.xlu0 %2091
        %2093 = vrot.lane.b32.xlu0 %v1269, 1
        %v2094 = vpop.permute.xlu0 %2093
        %2095 = vrot.lane.b32.xlu0 %v1275, 1
        %v2096 = vpop.permute.xlu0 %2095
        %2097 = vrot.lane.b32.xlu0 %v1279, 1
        %v2098 = vpop.permute.xlu0 %2097
        %2099 = vrot.lane.b32.xlu0 %v1285, 1
        %v2100 = vpop.permute.xlu0 %2099
        %2101 = vrot.lane.b32.xlu0 %v1289, 1
        %v2102 = vpop.permute.xlu0 %2101
        %vm2103 = vcmp.lt.s32.totalorder %v1886, 1
        %v2104 = vsel %vm2103, %v2072, %v2088
        %v2105 = vsel %vm2103, %v2074, %v2090
        %v2106 = vsel %vm2103, %v2076, %v2092
        %v2107 = vsel %vm2103, %v2078, %v2094
        %v2108 = vsel %vm2103, %v2080, %v2096
        %v2109 = vsel %vm2103, %v2082, %v2098
        %v2110 = vsel %vm2103, %v2084, %v2100
        %v2111 = vsel %vm2103, %v2086, %v2102
        %v2112 = vsel %vm2103, %v2056, %v2072
        %v2113 = vsel %vm2103, %v2058, %v2074
        %v2114 = vsel %vm2103, %v2060, %v2076
        %v2115 = vsel %vm2103, %v2062, %v2078
        %v2116 = vsel %vm2103, %v2064, %v2080
        %v2117 = vsel %vm2103, %v2066, %v2082
        %v2118 = vsel %vm2103, %v2068, %v2084
        %v2119 = vsel %vm2103, %v2070, %v2086
        %v2120 = vsel %vm2103, %v2040, %v2056
        %v2121 = vsel %vm2103, %v2042, %v2058
        %v2122 = vsel %vm2103, %v2044, %v2060
        %v2123 = vsel %vm2103, %v2046, %v2062
        %v2124 = vsel %vm2103, %v2048, %v2064
        %v2125 = vsel %vm2103, %v2050, %v2066
        %v2126 = vsel %vm2103, %v2052, %v2068
        %v2127 = vsel %vm2103, %v2054, %v2070
        %v2128 = vsel %vm2103, %v2088, %v2040
        %v2129 = vsel %vm2103, %v2090, %v2042
        %v2130 = vsel %vm2103, %v2092, %v2044
        %v2131 = vsel %vm2103, %v2094, %v2046
        %v2132 = vsel %vm2103, %v2096, %v2048
        %v2133 = vsel %vm2103, %v2098, %v2050
        %v2134 = vsel %vm2103, %v2100, %v2052
        %v2135 = vsel %vm2103, %v2102, %v2054
        %v2136 = vsel %vm1938, %v2023, %v2128
        %v2137 = vsel %vm1939, %v2015, %v2120
        %v2138 = vsel %vm1940, %v2007, %v2112
        %v2139 = vsel %vm1941, %v2031, %v2104
        %v2140 = vsel %vm1938, %v2024, %v2129
        %v2141 = vsel %vm1939, %v2016, %v2121
        %v2142 = vsel %vm1940, %v2008, %v2113
        %v2143 = vsel %vm1941, %v2032, %v2105
        %v2144 = vsel %vm1938, %v2025, %v2130
        %v2145 = vsel %vm1939, %v2017, %v2122
        %v2146 = vsel %vm1940, %v2009, %v2114
        %v2147 = vsel %vm1941, %v2033, %v2106
        %v2148 = vsel %vm1938, %v2026, %v2131
        %v2149 = vsel %vm1939, %v2018, %v2123
        %v2150 = vsel %vm1940, %v2010, %v2115
        %v2151 = vsel %vm1941, %v2034, %v2107
        %v2152 = vsel %vm1938, %v2027, %v2132
        %v2153 = vsel %vm1939, %v2019, %v2124
        %v2154 = vsel %vm1940, %v2011, %v2116
        %v2155 = vsel %vm1941, %v2035, %v2108
        %v2156 = vsel %vm1938, %v2028, %v2133
        %v2157 = vsel %vm1939, %v2020, %v2125
        %v2158 = vsel %vm1940, %v2012, %v2117
        %v2159 = vsel %vm1941, %v2036, %v2109
        %v2160 = vsel %vm1938, %v2029, %v2134
        %v2161 = vsel %vm1939, %v2021, %v2126
        %v2162 = vsel %vm1940, %v2013, %v2118
        %v2163 = vsel %vm1941, %v2037, %v2110
        %v2164 = vsel %vm1938, %v2030, %v2135
        %v2165 = vsel %vm1939, %v2022, %v2127
        %v2166 = vsel %vm1940, %v2014, %v2119
        %v2167 = vsel %vm1941, %v2038, %v2111
        %v2168 = vmul.f32 %v1180, %v1821
        %v2169 = vmul.f32 %v1182, %v1822
        %v2170 = vmul.f32 %v1253, %v1823
        %v2171 = vmul.f32 %v1255, %v1824
        %v2172 = vmul.f32 %v1184, %v1825
        %v2173 = vmul.f32 %v1186, %v1826
        %v2174 = vmul.f32 %v1257, %v1827
        %v2175 = vmul.f32 %v1259, %v1828
        %v2176 = vmul.f32 %v1190, %v1829
        %v2177 = vmul.f32 %v1192, %v1830
        %v2178 = vmul.f32 %v1263, %v1831
        %v2179 = vmul.f32 %v1265, %v1832
        %v2180 = vmul.f32 %v1194, %v1833
        %v2181 = vmul.f32 %v1196, %v1834
        %v2182 = vmul.f32 %v1267, %v1835
        %v2183 = vmul.f32 %v1269, %v1836
        %v2184 = vmul.f32 %v1200, %v1837
        %v2185 = vmul.f32 %v1202, %v1838
        %v2186 = vmul.f32 %v1273, %v1839
        %v2187 = vmul.f32 %v1275, %v1840
        %v2188 = vmul.f32 %v1204, %v1841
        %v2189 = vmul.f32 %v1206, %v1842
        %v2190 = vmul.f32 %v1277, %v1843
        %v2191 = vmul.f32 %v1279, %v1844
        %v2192 = vmul.f32 %v1210, %v1845
        %v2193 = vmul.f32 %v1212, %v1846
        %v2194 = vmul.f32 %v1283, %v1847
        %v2195 = vmul.f32 %v1285, %v1848
        %v2196 = vmul.f32 %v1214, %v1849
        %v2197 = vmul.f32 %v1216, %v1850
        %v2198 = vmul.f32 %v1287, %v1851
        %v2199 = vmul.f32 %v1289, %v1852
        %v2200 = vmul.f32 %v2136, %v1853
        %v2201 = vmul.f32 %v2137, %v1854
        %v2202 = vmul.f32 %v2138, %v1855
        %v2203 = vmul.f32 %v2139, %v1856
        %v2204 = vmul.f32 %v2140, %v1857
        %v2205 = vmul.f32 %v2141, %v1858
        %v2206 = vmul.f32 %v2142, %v1859
        %v2207 = vmul.f32 %v2143, %v1860
        %v2208 = vmul.f32 %v2144, %v1861
        %v2209 = vmul.f32 %v2145, %v1862
        %v2210 = vmul.f32 %v2146, %v1863
        %v2211 = vmul.f32 %v2147, %v1864
        %v2212 = vmul.f32 %v2148, %v1865
        %v2213 = vmul.f32 %v2149, %v1866
        %v2214 = vmul.f32 %v2150, %v1867
        %v2215 = vmul.f32 %v2151, %v1868
        %v2216 = vmul.f32 %v2152, %v1869
        %v2217 = vmul.f32 %v2153, %v1870
        %v2218 = vmul.f32 %v2154, %v1871
        %v2219 = vmul.f32 %v2155, %v1872
        %v2220 = vmul.f32 %v2156, %v1873
        %v2221 = vmul.f32 %v2157, %v1874
        %v2222 = vmul.f32 %v2158, %v1875
        %v2223 = vmul.f32 %v2159, %v1876
        %v2224 = vmul.f32 %v2160, %v1877
        %v2225 = vmul.f32 %v2161, %v1878
        %v2226 = vmul.f32 %v2162, %v1879
        %v2227 = vmul.f32 %v2163, %v1880
        %v2228 = vmul.f32 %v2164, %v1881
        %v2229 = vmul.f32 %v2165, %v1882
        %v2230 = vmul.f32 %v2166, %v1883
        %v2231 = vmul.f32 %v2167, %v1884
        %v2232 = vadd.f32 %v2168, %v2200
        %v2233 = vadd.f32 %v2169, %v2201
        %v2234 = vadd.f32 %v2170, %v2202
        %v2235 = vadd.f32 %v2171, %v2203
        %v2236 = vadd.f32 %v2172, %v2204
        %v2237 = vadd.f32 %v2173, %v2205
        %v2238 = vadd.f32 %v2174, %v2206
        %v2239 = vadd.f32 %v2175, %v2207
        %v2240 = vadd.f32 %v2176, %v2208
        %v2241 = vadd.f32 %v2177, %v2209
        %v2242 = vadd.f32 %v2178, %v2210
        %v2243 = vadd.f32 %v2179, %v2211
        %v2244 = vadd.f32 %v2180, %v2212
        %v2245 = vadd.f32 %v2181, %v2213
        %v2246 = vadd.f32 %v2182, %v2214
        %v2247 = vadd.f32 %v2183, %v2215
        %v2248 = vadd.f32 %v2184, %v2216
        %v2249 = vadd.f32 %v2185, %v2217
        %v2250 = vadd.f32 %v2186, %v2218
        %v2251 = vadd.f32 %v2187, %v2219
        %v2252 = vadd.f32 %v2188, %v2220
        %v2253 = vadd.f32 %v2189, %v2221
        %v2254 = vadd.f32 %v2190, %v2222
        %v2255 = vadd.f32 %v2191, %v2223
        %v2256 = vadd.f32 %v2192, %v2224
        %v2257 = vadd.f32 %v2193, %v2225
        %v2258 = vadd.f32 %v2194, %v2226
        %v2259 = vadd.f32 %v2195, %v2227
        %v2260 = vadd.f32 %v2196, %v2228
        %v2261 = vadd.f32 %v2197, %v2229
        %v2262 = vadd.f32 %v2198, %v2230
        %v2263 = vadd.f32 %v2199, %v2231
        %v2264 = vpack.c.bf16 %v2236, %v2232
        %v2265 = vpack.c.bf16 %v2237, %v2233
        %v2266 = vpack.c.bf16 %v2238, %v2234
        %v2267 = vpack.c.bf16 %v2239, %v2235
        %v2268 = vpack.c.bf16 %v2244, %v2240
        %v2269 = vpack.c.bf16 %v2245, %v2241
        %v2270 = vpack.c.bf16 %v2246, %v2242
        %v2271 = vpack.c.bf16 %v2247, %v2243
        %v2272 = vpack.c.bf16 %v2252, %v2248
        %v2273 = vpack.c.bf16 %v2253, %v2249
        %v2274 = vpack.c.bf16 %v2254, %v2250
        %v2275 = vpack.c.bf16 %v2255, %v2251
        %v2276 = vpack.c.bf16 %v2260, %v2256
        %v2277 = vpack.c.bf16 %v2261, %v2257
        %v2278 = vpack.c.bf16 %v2262, %v2258
        %v2279 = vpack.c.bf16 %v2263, %v2259
        %v2296 = vunpack.c.l.b16 %v2264
        %v2297 = vunpack.c.l.b16 %v2265
        %v2298 = vunpack.c.l.b16 %v2266
        %v2299 = vunpack.c.l.b16 %v2267
        %v2300 = vunpack.c.h.b16 %v2264
        %v2301 = vunpack.c.h.b16 %v2265
        %v2302 = vunpack.c.h.b16 %v2266
        %v2303 = vunpack.c.h.b16 %v2267
        %v2304 = vunpack.c.l.b16 %v2268
        %v2305 = vunpack.c.l.b16 %v2269
        %v2306 = vunpack.c.l.b16 %v2270
        %v2307 = vunpack.c.l.b16 %v2271
        %v2308 = vunpack.c.h.b16 %v2268
        %v2309 = vunpack.c.h.b16 %v2269
        %v2310 = vunpack.c.h.b16 %v2270
        %v2311 = vunpack.c.h.b16 %v2271
        %v2312 = vunpack.c.l.b16 %v2272
        %v2313 = vunpack.c.l.b16 %v2273
        %v2314 = vunpack.c.l.b16 %v2274
        %v2315 = vunpack.c.l.b16 %v2275
        %v2316 = vunpack.c.h.b16 %v2272
        %v2317 = vunpack.c.h.b16 %v2273
        %v2318 = vunpack.c.h.b16 %v2274
        %v2319 = vunpack.c.h.b16 %v2275
        %v2320 = vunpack.c.l.b16 %v2276
        %v2321 = vunpack.c.l.b16 %v2277
        %v2322 = vunpack.c.l.b16 %v2278
        %v2323 = vunpack.c.l.b16 %v2279
        %v2324 = vunpack.c.h.b16 %v2276
        %v2325 = vunpack.c.h.b16 %v2277
        %v2326 = vunpack.c.h.b16 %v2278
        %v2327 = vunpack.c.h.b16 %v2279
        %v2328 = vpack.c.b16 %v2297, %v2296
        %v2329 = vpack.c.b16 %v2299, %v2298
        %v2330 = vpack.c.b16 %v2301, %v2300
        %v2331 = vpack.c.b16 %v2303, %v2302
        %v2332 = vpack.c.b16 %v2305, %v2304
        %v2333 = vpack.c.b16 %v2307, %v2306
        %v2334 = vpack.c.b16 %v2309, %v2308
        %v2335 = vpack.c.b16 %v2311, %v2310
        %v2336 = vpack.c.b16 %v2313, %v2312
        %v2337 = vpack.c.b16 %v2315, %v2314
        %v2338 = vpack.c.b16 %v2317, %v2316
        %v2339 = vpack.c.b16 %v2319, %v2318
        %v2340 = vpack.c.b16 %v2321, %v2320
        %v2341 = vpack.c.b16 %v2323, %v2322
        %v2342 = vpack.c.b16 %v2325, %v2324
        %v2343 = vpack.c.b16 %v2327, %v2326
        %2360 = vst [vmem:[%s605] sm:$0xff] %v2328
        %2361 = vst [vmem:[%s605 + $0x8] sm:$0xff] %v2329
        %2362 = vst [vmem:[%s605 + $0x10] sm:$0xff] %v2330
        %2363 = vst [vmem:[%s605 + $0x18] sm:$0xff] %v2331
        %2364 = vst [vmem:[%s605 + $0x20] sm:$0xff] %v2332
        %2365 = vst [vmem:[%s605 + $0x28] sm:$0xff] %v2333
        %2366 = vst [vmem:[%s605 + $0x30] sm:$0xff] %v2334
        %2367 = vst [vmem:[%s605 + $0x38] sm:$0xff] %v2335
        %2368 = vst [vmem:[%s605 + $0x40] sm:$0xff] %v2336
        %2369 = vst [vmem:[%s605 + $0x48] sm:$0xff] %v2337
        %2370 = vst [vmem:[%s605 + $0x50] sm:$0xff] %v2338
        %2371 = vst [vmem:[%s605 + $0x58] sm:$0xff] %v2339
        %2372 = vst [vmem:[%s605 + $0x60] sm:$0xff] %v2340
        %2373 = vst [vmem:[%s605 + $0x68] sm:$0xff] %v2341
        %2374 = vst [vmem:[%s605 + $0x70] sm:$0xff] %v2342
        %2375 = vst [vmem:[%s605 + $0x78] sm:$0xff] %v2343
        %v2376 = vld [vmem:[%s542] sm:$0xff]
        %v2377 = vld [vmem:[%s542 + $0x8] sm:$0xff]
        %v2378 = vld [vmem:[%s542 + $0x10] sm:$0xff]
        %v2379 = vld [vmem:[%s542 + $0x18] sm:$0xff]
        %v2380 = vld [vmem:[%s542 + $0x20] sm:$0xff]
        %v2381 = vld [vmem:[%s542 + $0x28] sm:$0xff]
        %v2382 = vld [vmem:[%s542 + $0x30] sm:$0xff]
        %v2383 = vld [vmem:[%s542 + $0x38] sm:$0xff]
        %v2384 = vld [vmem:[%s542 + $0x40] sm:$0xff]
        %v2385 = vld [vmem:[%s542 + $0x48] sm:$0xff]
        %v2386 = vld [vmem:[%s542 + $0x50] sm:$0xff]
        %v2387 = vld [vmem:[%s542 + $0x58] sm:$0xff]
        %v2388 = vld [vmem:[%s542 + $0x60] sm:$0xff]
        %v2389 = vld [vmem:[%s542 + $0x68] sm:$0xff]
        %v2390 = vld [vmem:[%s542 + $0x70] sm:$0xff]
        %v2391 = vld [vmem:[%s542 + $0x78] sm:$0xff]
        %v2392 = vld [vmem:[%s551] sm:$0xff]
        %v2393 = vld [vmem:[%s551 + $0x8] sm:$0xff]
        %v2394 = vld [vmem:[%s551 + $0x10] sm:$0xff]
        %v2395 = vld [vmem:[%s551 + $0x18] sm:$0xff]
        %v2396 = vld [vmem:[%s551 + $0x20] sm:$0xff]
        %v2397 = vld [vmem:[%s551 + $0x28] sm:$0xff]
        %v2398 = vld [vmem:[%s551 + $0x30] sm:$0xff]
        %v2399 = vld [vmem:[%s551 + $0x38] sm:$0xff]
        %v2400 = vld [vmem:[%s551 + $0x40] sm:$0xff]
        %v2401 = vld [vmem:[%s551 + $0x48] sm:$0xff]
        %v2402 = vld [vmem:[%s551 + $0x50] sm:$0xff]
        %v2403 = vld [vmem:[%s551 + $0x58] sm:$0xff]
        %v2404 = vld [vmem:[%s551 + $0x60] sm:$0xff]
        %v2405 = vld [vmem:[%s551 + $0x68] sm:$0xff]
        %v2406 = vld [vmem:[%s551 + $0x70] sm:$0xff]
        %v2407 = vld [vmem:[%s551 + $0x78] sm:$0xff]
        %2408 = vrot.lane.b32.xlu0 %v1518, 127
        %v2409 = vpop.permute.xlu0 %2408
        %2410 = vrot.lane.b32.xlu0 %v1522, 127
        %v2411 = vpop.permute.xlu0 %2410
        %2412 = vrot.lane.b32.xlu0 %v1528, 127
        %v2413 = vpop.permute.xlu0 %2412
        %2414 = vrot.lane.b32.xlu0 %v1532, 127
        %v2415 = vpop.permute.xlu0 %2414
        %2416 = vrot.lane.b32.xlu0 %v1538, 127
        %v2417 = vpop.permute.xlu0 %2416
        %2418 = vrot.lane.b32.xlu0 %v1542, 127
        %v2419 = vpop.permute.xlu0 %2418
        %2420 = vrot.lane.b32.xlu0 %v1548, 127
        %v2421 = vpop.permute.xlu0 %2420
        %2422 = vrot.lane.b32.xlu0 %v1552, 127
        %v2423 = vpop.permute.xlu0 %2422
        %2424 = vrot.lane.b32.xlu0 %v1520, 127
        %v2425 = vpop.permute.xlu0 %2424
        %2426 = vrot.lane.b32.xlu0 %v1524, 127
        %v2427 = vpop.permute.xlu0 %2426
        %2428 = vrot.lane.b32.xlu0 %v1530, 127
        %v2429 = vpop.permute.xlu0 %2428
        %2430 = vrot.lane.b32.xlu0 %v1534, 127
        %v2431 = vpop.permute.xlu0 %2430
        %2432 = vrot.lane.b32.xlu0 %v1540, 127
        %v2433 = vpop.permute.xlu0 %2432
        %2434 = vrot.lane.b32.xlu0 %v1544, 127
        %v2435 = vpop.permute.xlu0 %2434
        %2436 = vrot.lane.b32.xlu0 %v1550, 127
        %v2437 = vpop.permute.xlu0 %2436
        %2438 = vrot.lane.b32.xlu0 %v1554, 127
        %v2439 = vpop.permute.xlu0 %2438
        %v2440 = vsel %vm2006, %v2409, %v2425
        %v2441 = vsel %vm2006, %v2411, %v2427
        %v2442 = vsel %vm2006, %v2413, %v2429
        %v2443 = vsel %vm2006, %v2415, %v2431
        %v2444 = vsel %vm2006, %v2417, %v2433
        %v2445 = vsel %vm2006, %v2419, %v2435
        %v2446 = vsel %vm2006, %v2421, %v2437
        %v2447 = vsel %vm2006, %v2423, %v2439
        %v2448 = vsel %vm2006, %v2425, %v2409
        %v2449 = vsel %vm2006, %v2427, %v2411
        %v2450 = vsel %vm2006, %v2429, %v2413
        %v2451 = vsel %vm2006, %v2431, %v2415
        %v2452 = vsel %vm2006, %v2433, %v2417
        %v2453 = vsel %vm2006, %v2435, %v2419
        %v2454 = vsel %vm2006, %v2437, %v2421
        %v2455 = vsel %vm2006, %v2439, %v2423
        %2456 = vrot.lane.b32.xlu0 %v1518, 1
        %v2457 = vpop.permute.xlu0 %2456
        %2458 = vrot.lane.b32.xlu0 %v1522, 1
        %v2459 = vpop.permute.xlu0 %2458
        %2460 = vrot.lane.b32.xlu0 %v1528, 1
        %v2461 = vpop.permute.xlu0 %2460
        %2462 = vrot.lane.b32.xlu0 %v1532, 1
        %v2463 = vpop.permute.xlu0 %2462
        %2464 = vrot.lane.b32.xlu0 %v1538, 1
        %v2465 = vpop.permute.xlu0 %2464
        %2466 = vrot.lane.b32.xlu0 %v1542, 1
        %v2467 = vpop.permute.xlu0 %2466
        %2468 = vrot.lane.b32.xlu0 %v1548, 1
        %v2469 = vpop.permute.xlu0 %2468
        %2470 = vrot.lane.b32.xlu0 %v1552, 1
        %v2471 = vpop.permute.xlu0 %2470
        %2472 = vrot.lane.b32.xlu0 %v1520, 1
        %v2473 = vpop.permute.xlu0 %2472
        %2474 = vrot.lane.b32.xlu0 %v1524, 1
        %v2475 = vpop.permute.xlu0 %2474
        %2476 = vrot.lane.b32.xlu0 %v1530, 1
        %v2477 = vpop.permute.xlu0 %2476
        %2478 = vrot.lane.b32.xlu0 %v1534, 1
        %v2479 = vpop.permute.xlu0 %2478
        %2480 = vrot.lane.b32.xlu0 %v1540, 1
        %v2481 = vpop.permute.xlu0 %2480
        %2482 = vrot.lane.b32.xlu0 %v1544, 1
        %v2483 = vpop.permute.xlu0 %2482
        %2484 = vrot.lane.b32.xlu0 %v1550, 1
        %v2485 = vpop.permute.xlu0 %2484
        %2486 = vrot.lane.b32.xlu0 %v1554, 1
        %v2487 = vpop.permute.xlu0 %2486
        %v2488 = vsel %vm2103, %v2457, %v2473
        %v2489 = vsel %vm2103, %v2459, %v2475
        %v2490 = vsel %vm2103, %v2461, %v2477
        %v2491 = vsel %vm2103, %v2463, %v2479
        %v2492 = vsel %vm2103, %v2465, %v2481
        %v2493 = vsel %vm2103, %v2467, %v2483
        %v2494 = vsel %vm2103, %v2469, %v2485
        %v2495 = vsel %vm2103, %v2471, %v2487
        %v2496 = vsel %vm2103, %v2473, %v2457
        %v2497 = vsel %vm2103, %v2475, %v2459
        %v2498 = vsel %vm2103, %v2477, %v2461
        %v2499 = vsel %vm2103, %v2479, %v2463
        %v2500 = vsel %vm2103, %v2481, %v2465
        %v2501 = vsel %vm2103, %v2483, %v2467
        %v2502 = vsel %vm2103, %v2485, %v2469
        %v2503 = vsel %vm2103, %v2487, %v2471
        %v2504 = vsel %vm1938, %v2440, %v2496
        %v2505 = vsel %vm1939, %v2448, %v2488
        %v2506 = vsel %vm1938, %v2441, %v2497
        %v2507 = vsel %vm1939, %v2449, %v2489
        %v2508 = vsel %vm1938, %v2442, %v2498
        %v2509 = vsel %vm1939, %v2450, %v2490
        %v2510 = vsel %vm1938, %v2443, %v2499
        %v2511 = vsel %vm1939, %v2451, %v2491
        %v2512 = vsel %vm1938, %v2444, %v2500
        %v2513 = vsel %vm1939, %v2452, %v2492
        %v2514 = vsel %vm1938, %v2445, %v2501
        %v2515 = vsel %vm1939, %v2453, %v2493
        %v2516 = vsel %vm1938, %v2446, %v2502
        %v2517 = vsel %vm1939, %v2454, %v2494
        %v2518 = vsel %vm1938, %v2447, %v2503
        %v2519 = vsel %vm1939, %v2455, %v2495
        %v2520 = vmul.f32 %v1518, %v2376
        %v2521 = vmul.f32 %v1520, %v2377
        %v2522 = vmul.f32 %v1522, %v2378
        %v2523 = vmul.f32 %v1524, %v2379
        %v2524 = vmul.f32 %v1528, %v2380
        %v2525 = vmul.f32 %v1530, %v2381
        %v2526 = vmul.f32 %v1532, %v2382
        %v2527 = vmul.f32 %v1534, %v2383
        %v2528 = vmul.f32 %v1538, %v2384
        %v2529 = vmul.f32 %v1540, %v2385
        %v2530 = vmul.f32 %v1542, %v2386
        %v2531 = vmul.f32 %v1544, %v2387
        %v2532 = vmul.f32 %v1548, %v2388
        %v2533 = vmul.f32 %v1550, %v2389
        %v2534 = vmul.f32 %v1552, %v2390
        %v2535 = vmul.f32 %v1554, %v2391
        %v2536 = vmul.f32 %v2504, %v2392
        %v2537 = vmul.f32 %v2505, %v2393
        %v2538 = vmul.f32 %v2506, %v2394
        %v2539 = vmul.f32 %v2507, %v2395
        %v2540 = vmul.f32 %v2508, %v2396
        %v2541 = vmul.f32 %v2509, %v2397
        %v2542 = vmul.f32 %v2510, %v2398
        %v2543 = vmul.f32 %v2511, %v2399
        %v2544 = vmul.f32 %v2512, %v2400
        %v2545 = vmul.f32 %v2513, %v2401
        %v2546 = vmul.f32 %v2514, %v2402
        %v2547 = vmul.f32 %v2515, %v2403
        %v2548 = vmul.f32 %v2516, %v2404
        %v2549 = vmul.f32 %v2517, %v2405
        %v2550 = vmul.f32 %v2518, %v2406
        %v2551 = vmul.f32 %v2519, %v2407
        %v2552 = vadd.f32 %v2520, %v2536
        %v2553 = vadd.f32 %v2521, %v2537
        %v2554 = vadd.f32 %v2522, %v2538
        %v2555 = vadd.f32 %v2523, %v2539
        %v2556 = vadd.f32 %v2524, %v2540
        %v2557 = vadd.f32 %v2525, %v2541
        %v2558 = vadd.f32 %v2526, %v2542
        %v2559 = vadd.f32 %v2527, %v2543
        %v2560 = vadd.f32 %v2528, %v2544
        %v2561 = vadd.f32 %v2529, %v2545
        %v2562 = vadd.f32 %v2530, %v2546
        %v2563 = vadd.f32 %v2531, %v2547
        %v2564 = vadd.f32 %v2532, %v2548
        %v2565 = vadd.f32 %v2533, %v2549
        %v2566 = vadd.f32 %v2534, %v2550
        %v2567 = vadd.f32 %v2535, %v2551
        %v2568 = vpack.c.bf16 %v2554, %v2552
        %v2569 = vpack.c.bf16 %v2555, %v2553
        %v2570 = vpack.c.bf16 %v2558, %v2556
        %v2571 = vpack.c.bf16 %v2559, %v2557
        %v2572 = vpack.c.bf16 %v2562, %v2560
        %v2573 = vpack.c.bf16 %v2563, %v2561
        %v2574 = vpack.c.bf16 %v2566, %v2564
        %v2575 = vpack.c.bf16 %v2567, %v2565
        %v2584 = vunpack.c.l.b16 %v2568
        %v2585 = vunpack.c.l.b16 %v2569
        %v2586 = vunpack.c.h.b16 %v2568
        %v2587 = vunpack.c.h.b16 %v2569
        %v2588 = vunpack.c.l.b16 %v2570
        %v2589 = vunpack.c.l.b16 %v2571
        %v2590 = vunpack.c.h.b16 %v2570
        %v2591 = vunpack.c.h.b16 %v2571
        %v2592 = vunpack.c.l.b16 %v2572
        %v2593 = vunpack.c.l.b16 %v2573
        %v2594 = vunpack.c.h.b16 %v2572
        %v2595 = vunpack.c.h.b16 %v2573
        %v2596 = vunpack.c.l.b16 %v2574
        %v2597 = vunpack.c.l.b16 %v2575
        %v2598 = vunpack.c.h.b16 %v2574
        %v2599 = vunpack.c.h.b16 %v2575
        %v2600 = vpack.c.b16 %v2585, %v2584
        %v2601 = vpack.c.b16 %v2587, %v2586
        %v2602 = vpack.c.b16 %v2589, %v2588
        %v2603 = vpack.c.b16 %v2591, %v2590
        %v2604 = vpack.c.b16 %v2593, %v2592
        %v2605 = vpack.c.b16 %v2595, %v2594
        %v2606 = vpack.c.b16 %v2597, %v2596
        %v2607 = vpack.c.b16 %v2599, %v2598
        %2616 = vst [vmem:[%s612] sm:$0xff] %v2600
        %2617 = vst [vmem:[%s612 + $0x8] sm:$0xff] %v2601
        %2618 = vst [vmem:[%s612 + $0x10] sm:$0xff] %v2602
        %2619 = vst [vmem:[%s612 + $0x18] sm:$0xff] %v2603
        %2620 = vst [vmem:[%s612 + $0x20] sm:$0xff] %v2604
        %2621 = vst [vmem:[%s612 + $0x28] sm:$0xff] %v2605
        %2622 = vst [vmem:[%s612 + $0x30] sm:$0xff] %v2606
        %2623 = vst [vmem:[%s612 + $0x38] sm:$0xff] %v2607
        %v2624 = vpack.c.bf16 %v1787, %v1783
        %v2625 = vpack.c.bf16 %v1789, %v1785
        %v2626 = vpack.c.bf16 %v1797, %v1793
        %v2627 = vpack.c.bf16 %v1799, %v1795
        %v2628 = vpack.c.bf16 %v1807, %v1803
        %v2629 = vpack.c.bf16 %v1809, %v1805
        %v2630 = vpack.c.bf16 %v1817, %v1813
        %v2631 = vpack.c.bf16 %v1819, %v1815
        %v2640 = vunpack.c.l.b16 %v2624
        %v2641 = vunpack.c.l.b16 %v2625
        %v2642 = vunpack.c.h.b16 %v2624
        %v2643 = vunpack.c.h.b16 %v2625
        %v2644 = vunpack.c.l.b16 %v2626
        %v2645 = vunpack.c.l.b16 %v2627
        %v2646 = vunpack.c.h.b16 %v2626
        %v2647 = vunpack.c.h.b16 %v2627
        %v2648 = vunpack.c.l.b16 %v2628
        %v2649 = vunpack.c.l.b16 %v2629
        %v2650 = vunpack.c.h.b16 %v2628
        %v2651 = vunpack.c.h.b16 %v2629
        %v2652 = vunpack.c.l.b16 %v2630
        %v2653 = vunpack.c.l.b16 %v2631
        %v2654 = vunpack.c.h.b16 %v2630
        %v2655 = vunpack.c.h.b16 %v2631
        %v2656 = vpack.c.b16 %v2641, %v2640
        %v2657 = vpack.c.b16 %v2643, %v2642
        %v2658 = vpack.c.b16 %v2645, %v2644
        %v2659 = vpack.c.b16 %v2647, %v2646
        %v2660 = vpack.c.b16 %v2649, %v2648
        %v2661 = vpack.c.b16 %v2651, %v2650
        %v2662 = vpack.c.b16 %v2653, %v2652
        %v2663 = vpack.c.b16 %v2655, %v2654
        %2672 = vst [vmem:[%s619] sm:$0xff] %v2656
        %2673 = vst [vmem:[%s619 + $0x8] sm:$0xff] %v2657
        %2674 = vst [vmem:[%s619 + $0x10] sm:$0xff] %v2658
        %2675 = vst [vmem:[%s619 + $0x18] sm:$0xff] %v2659
        %2676 = vst [vmem:[%s619 + $0x20] sm:$0xff] %v2660
        %2677 = vst [vmem:[%s619 + $0x28] sm:$0xff] %v2661
        %2678 = vst [vmem:[%s619 + $0x30] sm:$0xff] %v2662
        %2679 = vst [vmem:[%s619 + $0x38] sm:$0xff] %v2663
        %s2680 = sand.u32 %s256, 1
        %s2681 = scalar_lea.sflag [#allocation4], %s2680
        %s2682 = sand.u32 %s256, 1
        %s2683 = smul.addr %s2682, 128
        %s2684 = scalar_lea.vmem [#allocation14], %s2683
        %s2685 = sand.u32 %s34, 1
        %s2686 = scalar_lea.sflag [#allocation16], %s2685
        %s2687 = sand.u32 %s282, 1
        %s2688 = smul.addr %s2687, 64
        %s2689 = scalar_lea.vmem [#allocation15], %s2688
        %s2690 = sand.u32 %s34, 1
        %s2691 = scalar_lea.sflag [#allocation16], %s2690
        %s2692 = sand.u32 %s308, 1
        %s2693 = smul.addr %s2692, 64
        %s2694 = scalar_lea.vmem [#allocation17], %s2693
        // Predicated region
        $region89: #{tpu_custom_call.1} parent=55 // pred_check
          %p2695 = pneg %p266
        $region90: #{tpu_custom_call.1} parent=55 // pred_check_branch
          %2697 = sbr.rel (%p2695) target = $region92
        $region91: #{tpu_custom_call.1} parent=55 // pred_region
          %s2698 = smul.u32 8, %s34
          %s2700 = ssub.s32 2048, 2048
          %2701 = vsyncadd %s2681, %s2700
          %s2702 = smul.addr %s2698, 4
          %s2703 = smul.addr %s2702, 64
          %s2704 = scalar_lea.hbm %s9, %s2703
          %s2705 = sshll.u32 %s2684, 4
          %s2706 = int_to_ptr.vmem [resolvable:$true] %s2705
          %2711 = dma.vmem_to_hbm [thread:$0]  %s2706, 2048, %s2704, %s2681, 256, 256, 16
        $region92: #{tpu_custom_call.1} parent=55 // pred_fallthru
          _
        // Predicated region
        $region93: #{tpu_custom_call.1} parent=55 // pred_check
          %p2712 = pneg %p292
        $region94: #{tpu_custom_call.1} parent=55 // pred_check_branch
          %2714 = sbr.rel (%p2712) target = $region96
        $region95: #{tpu_custom_call.1} parent=55 // pred_region
          %s2715 = smul.u32 8, %s34
          %s2717 = ssub.s32 1024, 1024
          %2718 = vsyncadd %s2686, %s2717
          %s2719 = smul.addr %s2715, 2
          %s2720 = smul.addr %s2719, 64
          %s2721 = scalar_lea.hbm %s10, %s2720
          %s2722 = sshll.u32 %s2689, 4
          %s2723 = int_to_ptr.vmem [resolvable:$true] %s2722
          %2728 = dma.vmem_to_hbm [thread:$0]  %s2723, 1024, %s2721, %s2686, 128, 128, 8
        $region96: #{tpu_custom_call.1} parent=55 // pred_fallthru
          _
        // Predicated region
        $region97: #{tpu_custom_call.1} parent=55 // pred_check
          %p2729 = pneg %p318
        $region98: #{tpu_custom_call.1} parent=55 // pred_check_branch
          %2731 = sbr.rel (%p2729) target = $region100
        $region99: #{tpu_custom_call.1} parent=55 // pred_region
          %s2732 = smul.u32 8, %s34
          %s2734 = ssub.s32 1024, 1024
          %2735 = vsyncadd %s2691, %s2734
          %s2736 = smul.addr %s2732, 2
          %s2737 = smul.addr %s2736, 64
          %s2738 = scalar_lea.hbm %s11, %s2737
          %s2739 = sshll.u32 %s2694, 4
          %s2740 = int_to_ptr.vmem [resolvable:$true] %s2739
          %2745 = dma.vmem_to_hbm [thread:$0]  %s2740, 1024, %s2738, %s2691, 128, 128, 8
        $region100: #{tpu_custom_call.1} parent=55 // pred_fallthru
          _
      $region56: #{tpu_custom_call.1} parent=5 // pred_fallthru
        _
      %p2746 = scmp.le.s32.totalorder 2, %s29
      // Predicated region
      $region101: #{tpu_custom_call.1} parent=5 // pred_check
        %p2747 = pneg %p2746
      $region102: #{tpu_custom_call.1} parent=5 // pred_check_branch
        %2749 = sbr.rel (%p2747) target = $region104
      $region103: #{tpu_custom_call.1} parent=5 // pred_region
        %s2750 = ssub.s32 %s29, 2
        // Predicated region
        $region105: #{tpu_custom_call.1} parent=103 // pred_check
          %p2751 = pneg %p272
        $region106: #{tpu_custom_call.1} parent=103 // pred_check_branch
          %2753 = sbr.rel (%p2751) target = $region108
        $region107: #{tpu_custom_call.1} parent=103 // pred_region
          %s2754 = sand.u32 %s257, 1
          %s2755 = scalar_lea.sflag [#allocation4], %s2754
          %s2756 = sand.u32 %s257, 1
          %s2757 = smul.addr %s2756, 128
          %s2758 = scalar_lea.vmem [#allocation14], %s2757
          %2759 = dma.done %s2755, 2048
        $region108: #{tpu_custom_call.1} parent=103 // pred_fallthru
          _
        // Predicated region
        $region109: #{tpu_custom_call.1} parent=103 // pred_check
          %p2760 = pneg %p298
        $region110: #{tpu_custom_call.1} parent=103 // pred_check_branch
          %2762 = sbr.rel (%p2760) target = $region112
        $region111: #{tpu_custom_call.1} parent=103 // pred_region
          %s2763 = sand.u32 %s35, 1
          %s2764 = scalar_lea.sflag [#allocation16], %s2763
          %s2765 = sand.u32 %s283, 1
          %s2766 = smul.addr %s2765, 64
          %s2767 = scalar_lea.vmem [#allocation15], %s2766
          %2768 = dma.done %s2764, 1024
        $region112: #{tpu_custom_call.1} parent=103 // pred_fallthru
          _
        // Predicated region
        $region113: #{tpu_custom_call.1} parent=103 // pred_check
          %p2769 = pneg %p324
        $region114: #{tpu_custom_call.1} parent=103 // pred_check_branch
          %2771 = sbr.rel (%p2769) target = $region116
        $region115: #{tpu_custom_call.1} parent=103 // pred_region
          %s2772 = sand.u32 %s35, 1
          %s2773 = scalar_lea.sflag [#allocation16], %s2772
          %s2774 = sand.u32 %s309, 1
          %s2775 = smul.addr %s2774, 64
          %s2776 = scalar_lea.vmem [#allocation17], %s2775
          %2777 = dma.done %s2773, 1024
        $region116: #{tpu_custom_call.1} parent=103 // pred_fallthru
          _
      $region104: #{tpu_custom_call.1} parent=5 // pred_fallthru
        _
    $region6: #{tpu_custom_call.1} parent=1 // loop_footer
      %s33 = sadd.s32 1, %s29
    $region7: #{tpu_custom_call.1} parent=1 // loop_footer_branch
      %28 = sbr.rel target = $region3
    $region8: #{tpu_custom_call.1} parent=1 // loop_exit
      _
    %2778 = vsyncpa [#allocation3], 1
    %s2779 = scalar_lea.sflag [#allocation3], 1
    %2780 = vsyncpa %s2779, 1
    %2781 = vsyncpa [#allocation6], 1
    %2782 = vsyncpa [#allocation9], 1
    %2783 = vsyncpa [#allocation4], 1
    %s2784 = scalar_lea.sflag [#allocation4], 1
    %2785 = vsyncpa %s2784, 1
    %2786 = vsyncpa [#allocation16], 1
    %s2787 = scalar_lea.sflag [#allocation16], 1
    %2788 = vsyncpa %s2787, 1

</llo_original>
